<compile_context>
chip_gen: v7x
topology: tpu7x:2x2x1
jax: 0.10.0
libtpu: 0.0.40
codegen_flags: <defaults>
</compile_context>

<pallas_src>
import math
from functools import reduce

import numpy as np
import jax
import jax.numpy as jnp
from jax.experimental import pallas as pl
from jax.experimental.pallas import tpu as pltpu

INPUT_SHAPE = (3, 20, 20)          # (Cin, H, W) -- matches the PyTorch module ctor
OUTPUT_SHAPE = (1, 3, 2, 2)        # default output_shape
OUTPUT_SIZE = reduce(lambda a, b: a * b, OUTPUT_SHAPE)

K1, C1 = 3, 8                      # conv1: kernel 3x3, out channels 8
K2, C2 = 5, 10                     # conv2: kernel 5x5, out channels 10
BLOCK_B = 8                        # samples per grid step (multiple of 8 keeps all
                                   # in-kernel reshapes layout-preserving)


def _feature_dims(h, w):
    h1, w1 = h - K1 + 1, w - K1 + 1      # conv1 valid
    hp1, wp1 = h1 // 2, w1 // 2          # maxpool 2x2 stride 2 (floor)
    h2, w2 = hp1 - K2 + 1, wp1 - K2 + 1  # conv2 valid
    hp2, wp2 = h2 // 2, w2 // 2          # maxpool 2x2 stride 2 (floor)
    return h1, w1, hp1, wp1, h2, w2, hp2, wp2


# --------------------------------------------------------------------------
# Parameters (deterministic synthetic init, PyTorch-style uniform bounds)
# --------------------------------------------------------------------------
def init_params(key, input_shape=INPUT_SHAPE):
    cin, h, w = input_shape
    _, _, _, _, _, _, hp2, wp2 = _feature_dims(h, w)
    feature_size = C2 * hp2 * wp2
    hidden = feature_size // 4

    ks = jax.random.split(key, 8)

    def u(k, shape, fan_in):
        b = 1.0 / math.sqrt(fan_in)
        return jax.random.uniform(k, shape, jnp.float32, -b, b)

    params = {
        # conv weights stored HWIO (matches the NHWC reference conv)
        "conv1_w": u(ks[0], (K1, K1, cin, C1), K1 * K1 * cin),
        "conv1_b": u(ks[1], (1, C1), K1 * K1 * cin),
        "conv2_w": u(ks[2], (K2, K2, C1, C2), K2 * K2 * C1),
        "conv2_b": u(ks[3], (1, C2), K2 * K2 * C1),
        # fc1 rows are in PyTorch (C, H, W)-flatten order
        "fc1_w": u(ks[4], (feature_size, hidden), feature_size),
        "fc1_b": u(ks[5], (1, hidden), feature_size),
        "fc2_w": u(ks[6], (hidden, OUTPUT_SIZE), hidden),
        "fc2_b": u(ks[7], (1, OUTPUT_SIZE), hidden),
    }
    return params, feature_size


# --------------------------------------------------------------------------
# One-time host-side parameter lowering (no math changes)
# --------------------------------------------------------------------------
def prepare_kernel_params(params, input_shape=INPUT_SHAPE):
    cin, h, w = input_shape
    H1, W1, Hp1, Wp1, H2, W2, Hp2, Wp2 = _feature_dims(h, w)
    feature_size = C2 * Hp2 * Wp2
    hidden = feature_size // 4

    w1 = np.asarray(params["conv1_w"], np.float32)   # (K1,K1,Cin,C1)
    w2 = np.asarray(params["conv2_w"], np.float32)   # (K2,K2,C1,C2)
    f1 = np.asarray(params["fc1_w"], np.float32)     # (feature_size, hidden) CHW rows

    # conv1 lowered weights: per tap-row ki, (Win*Cin, W1*C1)
    wrow1 = np.zeros((K1, w * cin, W1 * C1), np.float32)
    for ki in range(K1):
        for kj in range(K1):
            for c in range(cin):
                for wo in range(W1):
                    wrow1[ki, (wo + kj) * cin + c, wo * C1:(wo + 1) * C1] = w1[ki, kj, c, :]
    b1row = np.tile(np.asarray(params["conv1_b"], np.float32).reshape(1, C1), (1, W1))

    # pool1 stride-2 width selection (exact 0/1), even/odd: (W1*C1, Wp1*C1)
    sel1 = np.zeros((2, W1 * C1, Wp1 * C1), np.float32)
    for off in range(2):
        for pw in range(Wp1):
            for c in range(C1):
                sel1[off, (2 * pw + off) * C1 + c, pw * C1 + c] = 1.0

    # conv2 lowered weights: per tap-row ki, (Wp1*C1, W2*C2)
    wrow2 = np.zeros((K2, Wp1 * C1, W2 * C2), np.float32)
    for ki in range(K2):
        for kj in range(K2):
            for c in range(C1):
                for wo in range(W2):
                    wrow2[ki, (wo + kj) * C1 + c, wo * C2:(wo + 1) * C2] = w2[ki, kj, c, :]
    b2row = np.tile(np.asarray(params["conv2_b"], np.float32).reshape(1, C2), (1, W2))

    # pool2 stride-2 width selection, even/odd: (W2*C2, Wp2*C2)
    sel2 = np.zeros((2, W2 * C2, Wp2 * C2), np.float32)
    for off in range(2):
        for pw in range(Wp2):
            for c in range(C2):
                sel2[off, (2 * pw + off) * C2 + c, pw * C2 + c] = 1.0

    # fc1 with the PyTorch NCHW flatten folded in: per pooled-row ph, (Wp2*C2, hidden)
    wfc1 = np.zeros((Hp2, Wp2 * C2, hidden), np.float32)
    for ph in range(Hp2):
        for pw in range(Wp2):
            for c in range(C2):
                wfc1[ph, pw * C2 + c, :] = f1[c * (Hp2 * Wp2) + ph * Wp2 + pw, :]

    return {
        "wrow1": jnp.asarray(wrow1), "b1row": jnp.asarray(b1row), "sel1": jnp.asarray(sel1),
        "wrow2": jnp.asarray(wrow2), "b2row": jnp.asarray(b2row), "sel2": jnp.asarray(sel2),
        "wfc1": jnp.asarray(wfc1),
        "fc1_b": jnp.asarray(params["fc1_b"], jnp.float32),
        "fc2_w": jnp.asarray(params["fc2_w"], jnp.float32),
        "fc2_b": jnp.asarray(params["fc2_b"], jnp.float32),
    }


# --------------------------------------------------------------------------
# Fused forward pass: single pallas_call, batched blocks, 15 matmuls per block
# --------------------------------------------------------------------------
def conv_regressor_forward(x_nchw, kp, block_b=BLOCK_B):
    assert block_b % 8 == 0
    N, cin, Hin, Win = x_nchw.shape
    H1, W1, Hp1, Wp1, H2, W2, Hp2, Wp2 = _feature_dims(Hin, Win)
    hidden = kp["wfc1"].shape[-1]
    out_size = kp["fc2_w"].shape[1]

    B = block_b
    n_blocks = -(-N // B)
    Npad = n_blocks * B

    x = x_nchw.astype(jnp.float32)
    if Npad != N:
        x = jnp.pad(x, ((0, Npad - N), (0, 0), (0, 0), (0, 0)))
    # Single wrapper relayout: NCHW -> (H, N, W*C), c minor on lanes.
    xk = jnp.transpose(x, (2, 0, 3, 1)).reshape(Hin, Npad, Win * cin)

    def kernel(x_ref, wr1_ref, b1_ref, s1_ref, wr2_ref, b2_ref, s2_ref,
               wf1_ref, f1b_ref, f2w_ref, f2b_ref, o_ref):
        f32 = jnp.float32
        xb = x_ref[...]                                   # (Hin, B, Win*Cin)

        # ---- conv1: K1 row-shifted 2-D matmuls against lowered weights
        acc = None
        for ki in range(K1):
            xs = xb[ki:ki + H1].reshape(H1 * B, Win * cin)        # (18B, 60)
            p = jnp.dot(xs, wr1_ref[ki], preferred_element_type=f32)
            acc = p if acc is None else acc + p
        y1 = acc + b1_ref[...]                                    # (18B, W1*C1)

        # ---- maxpool1 2x2/2 + ReLU
        y1p = y1.reshape(Hp1, 2 * B, W1 * C1)
        hmax = jnp.maximum(y1p[:, :B, :], y1p[:, B:, :]).reshape(Hp1 * B, W1 * C1)
        a1 = jnp.maximum(
            jnp.maximum(jnp.dot(hmax, s1_ref[0], preferred_element_type=f32),
                        jnp.dot(hmax, s1_ref[1], preferred_element_type=f32)),
            0.0)                                                  # (9B, Wp1*C1)

        # ---- conv2: K2 row-shifted 2-D matmuls
        a1_3 = a1.reshape(Hp1, B, Wp1 * C1)
        acc = None
        for ki in range(K2):
            xs = a1_3[ki:ki + H2].reshape(H2 * B, Wp1 * C1)       # (5B, 72)
            p = jnp.dot(xs, wr2_ref[ki], preferred_element_type=f32)
            acc = p if acc is None else acc + p
        y2 = acc + b2_ref[...]                                    # (5B, W2*C2)

        # ---- maxpool2 2x2/2 (floor: drop conv2 row/col 4) + ReLU
        y2p = y2.reshape(H2, B, W2 * C2)[:2 * Hp2].reshape(Hp2, 2 * B, W2 * C2)
        hmax2 = jnp.maximum(y2p[:, :B, :], y2p[:, B:, :]).reshape(Hp2 * B, W2 * C2)
        a2 = jnp.maximum(
            jnp.maximum(jnp.dot(hmax2, s2_ref[0], preferred_element_type=f32),
                        jnp.dot(hmax2, s2_ref[1], preferred_element_type=f32)),
            0.0)                                                  # (2B, Wp2*C2)

        # ---- regressor: fc1 (NCHW flatten folded into wf1) -> ReLU -> fc2
        hdn = f1b_ref[...]
        for ph in range(Hp2):
            hdn = hdn + jnp.dot(a2[ph * B:(ph + 1) * B, :], wf1_ref[ph],
                                preferred_element_type=f32)
        hdn = jnp.maximum(hdn, 0.0)                               # (B, hidden)
        o_ref[...] = (jnp.dot(hdn, f2w_ref[...], preferred_element_type=f32)
                      + f2b_ref[...])

    def const_spec(a):
        nd = a.ndim
        return pl.BlockSpec(a.shape, lambda i, _z=(0,) * nd: _z)

    macs = (K1 * H1 * (Win * cin) * (W1 * C1) + 2 * Hp1 * (W1 * C1) * (Wp1 * C1)
            + K2 * H2 * (Wp1 * C1) * (W2 * C2) + 2 * Hp2 * (W2 * C2) * (Wp2 * C2)
            + Hp2 * (Wp2 * C2) * hidden + hidden * out_size)
    const_bytes = sum(int(np.prod(kp[k].shape)) * 4 for k in kp)

    out2d = pl.pallas_call(
        kernel,
        out_shape=jax.ShapeDtypeStruct((Npad, out_size), jnp.float32),
        grid=(n_blocks,),
        in_specs=[
            pl.BlockSpec((Hin, B, Win * cin), lambda i: (0, i, 0)),
            const_spec(kp["wrow1"]), const_spec(kp["b1row"]), const_spec(kp["sel1"]),
            const_spec(kp["wrow2"]), const_spec(kp["b2row"]), const_spec(kp["sel2"]),
            const_spec(kp["wfc1"]), const_spec(kp["fc1_b"]),
            const_spec(kp["fc2_w"]), const_spec(kp["fc2_b"]),
        ],
        out_specs=pl.BlockSpec((B, out_size), lambda i: (i, 0)),
        compiler_params=pltpu.CompilerParams(
            dimension_semantics=("parallel",),
            vmem_limit_bytes=32 * 1024 * 1024),
        cost_estimate=pl.CostEstimate(
            flops=2 * macs * Npad, transcendentals=0,
            bytes_accessed=int(xk.size) * 4 + Npad * out_size * 4 + const_bytes),
    )(xk, kp["wrow1"], kp["b1row"], kp["sel1"], kp["wrow2"], kp["b2row"],
      kp["sel2"], kp["wfc1"], kp["fc1_b"], kp["fc2_w"], kp["fc2_b"])

    return out2d[:N].reshape(N, *OUTPUT_SHAPE)


# --------------------------------------------------------------------------
# Pure-JAX reference (PyTorch-convention params, NCHW flatten)
# --------------------------------------------------------------------------
def reference_forward(x_nchw, params):
    dn = ("NHWC", "HWIO", "NHWC")
    x = jnp.transpose(x_nchw, (0, 2, 3, 1)).astype(jnp.float32)
    y = jax.lax.conv_general_dilated(x, params["conv1_w"], (1, 1), "VALID",
                                     dimension_numbers=dn)
    y = y + params["conv1_b"].reshape(1, 1, 1, -1)
    y = jax.lax.reduce_window(y, -jnp.inf, jax.lax.max,
                              (1, 2, 2, 1), (1, 2, 2, 1), "VALID")
    y = jnp.maximum(y, 0.0)
    y = jax.lax.conv_general_dilated(y, params["conv2_w"], (1, 1), "VALID",
                                     dimension_numbers=dn)
    y = y + params["conv2_b"].reshape(1, 1, 1, -1)
    y = jax.lax.reduce_window(y, -jnp.inf, jax.lax.max,
                              (1, 2, 2, 1), (1, 2, 2, 1), "VALID")
    y = jnp.maximum(y, 0.0)
    feat = jnp.transpose(y, (0, 3, 1, 2)).reshape(y.shape[0], -1)   # NCHW flatten
    h = jnp.maximum(feat @ params["fc1_w"] + params["fc1_b"], 0.0)
    o = h @ params["fc2_w"] + params["fc2_b"]
    return o.reshape(-1, *OUTPUT_SHAPE)


# --------------------------------------------------------------------------
if __name__ == "__main__":
    key = jax.random.PRNGKey(0)
    k_param, k_x = jax.random.split(key)

    params, feature_size = init_params(k_param)
    assert feature_size == 40, feature_size

    kparams = prepare_kernel_params(params)        # one-time host-side lowering

    batch = 16                                     # 2 grid blocks of BLOCK_B=8
    x = jax.random.normal(k_x, (batch,) + INPUT_SHAPE, dtype=jnp.float32)  # NCHW

    fwd = jax.jit(conv_regressor_forward)
    out = jax.block_until_ready(fwd(x, kparams))
    assert out.shape == (batch,) + OUTPUT_SHAPE, out.shape

    ref = jax.block_until_ready(reference_forward(x, params))
    assert jnp.allclose(out, ref, rtol=1e-3, atol=1e-3), (
        float(jnp.max(jnp.abs(out - ref)))
    )

    print("KERNEL_OK")
</pallas_src>

<mosaic_0001>
module attributes {stable_mosaic.version = 11 : i64} {
  func.func @kernel(%arg0: i32, %arg1: memref<20x8x60xf32, #tpu.memory_space<vmem>>, %arg2: memref<3x60x144xf32, #tpu.memory_space<vmem>>, %arg3: memref<1x144xf32, #tpu.memory_space<vmem>>, %arg4: memref<2x144x72xf32, #tpu.memory_space<vmem>>, %arg5: memref<5x72x50xf32, #tpu.memory_space<vmem>>, %arg6: memref<1x50xf32, #tpu.memory_space<vmem>>, %arg7: memref<2x50x20xf32, #tpu.memory_space<vmem>>, %arg8: memref<2x20x10xf32, #tpu.memory_space<vmem>>, %arg9: memref<1x10xf32, #tpu.memory_space<vmem>>, %arg10: memref<10x12xf32, #tpu.memory_space<vmem>>, %arg11: memref<1x12xf32, #tpu.memory_space<vmem>>, %arg12: memref<8x12xf32, #tpu.memory_space<vmem>>) attributes {dimension_semantics = [#tpu.dimension_semantics<parallel>], iteration_bounds = array<i64: 2>, scalar_prefetch = 0 : i64, scratch_operands = 0 : i64, tpu.core_type = #tpu.core_type<tc>, window_params = [{transform_indices = @transform_0, window_bounds = array<i64: 20, 8, 60>}, {pipeline_mode = #tpu.pipeline_mode<synchronous>, transform_indices = @transform_1, window_bounds = array<i64: 3, 60, 144>}, {pipeline_mode = #tpu.pipeline_mode<synchronous>, transform_indices = @transform_2, window_bounds = array<i64: 1, 144>}, {pipeline_mode = #tpu.pipeline_mode<synchronous>, transform_indices = @transform_3, window_bounds = array<i64: 2, 144, 72>}, {pipeline_mode = #tpu.pipeline_mode<synchronous>, transform_indices = @transform_4, window_bounds = array<i64: 5, 72, 50>}, {pipeline_mode = #tpu.pipeline_mode<synchronous>, transform_indices = @transform_5, window_bounds = array<i64: 1, 50>}, {pipeline_mode = #tpu.pipeline_mode<synchronous>, transform_indices = @transform_6, window_bounds = array<i64: 2, 50, 20>}, {pipeline_mode = #tpu.pipeline_mode<synchronous>, transform_indices = @transform_7, window_bounds = array<i64: 2, 20, 10>}, {pipeline_mode = #tpu.pipeline_mode<synchronous>, transform_indices = @transform_8, window_bounds = array<i64: 1, 10>}, {pipeline_mode = #tpu.pipeline_mode<synchronous>, transform_indices = @transform_9, window_bounds = array<i64: 10, 12>}, {pipeline_mode = #tpu.pipeline_mode<synchronous>, transform_indices = @transform_10, window_bounds = array<i64: 1, 12>}, {transform_indices = @transform_11, window_bounds = array<i64: 8, 12>}]} {
    %c0 = arith.constant 0 : index
    %c0_0 = arith.constant 0 : index
    %c0_1 = arith.constant 0 : index
    %0 = vector.load %arg1[%c0, %c0_0, %c0_1] : memref<20x8x60xf32, #tpu.memory_space<vmem>>, vector<20x8x60xf32>
    %1 = vector.extract_strided_slice %0 {offsets = [0, 0, 0], sizes = [18, 8, 60], strides = [1, 1, 1]} : vector<20x8x60xf32> to vector<18x8x60xf32>
    %2 = vector.shape_cast %1 : vector<18x8x60xf32> to vector<144x60xf32>
    %c0_2 = arith.constant 0 : index
    %c0_3 = arith.constant 0 : index
    %c0_4 = arith.constant 0 : index
    %3 = vector.load %arg2[%c0_2, %c0_3, %c0_4] : memref<3x60x144xf32, #tpu.memory_space<vmem>>, vector<1x60x144xf32>
    %4 = vector.shape_cast %3 : vector<1x60x144xf32> to vector<60x144xf32>
    %cst = arith.constant dense<0.000000e+00> : vector<144x144xf32>
    %5 = tpu.matmul %2, %4, %cst {dimension_numbers = #tpu.dot_dimension_numbers<[1], [0], [0], [1], [0, 0, 1, 1], [], []>} : vector<144x60xf32>, vector<60x144xf32>, vector<144x144xf32> -> vector<144x144xf32>
    %6 = vector.extract_strided_slice %0 {offsets = [1, 0, 0], sizes = [18, 8, 60], strides = [1, 1, 1]} : vector<20x8x60xf32> to vector<18x8x60xf32>
    %7 = vector.shape_cast %6 : vector<18x8x60xf32> to vector<144x60xf32>
    %c1 = arith.constant 1 : index
    %c0_5 = arith.constant 0 : index
    %c0_6 = arith.constant 0 : index
    %8 = vector.load %arg2[%c1, %c0_5, %c0_6] : memref<3x60x144xf32, #tpu.memory_space<vmem>>, vector<1x60x144xf32>
    %9 = vector.shape_cast %8 : vector<1x60x144xf32> to vector<60x144xf32>
    %cst_7 = arith.constant dense<0.000000e+00> : vector<144x144xf32>
    %10 = tpu.matmul %7, %9, %cst_7 {dimension_numbers = #tpu.dot_dimension_numbers<[1], [0], [0], [1], [0, 0, 1, 1], [], []>} : vector<144x60xf32>, vector<60x144xf32>, vector<144x144xf32> -> vector<144x144xf32>
    %11 = arith.addf %5, %10 : vector<144x144xf32>
    %12 = vector.extract_strided_slice %0 {offsets = [2, 0, 0], sizes = [18, 8, 60], strides = [1, 1, 1]} : vector<20x8x60xf32> to vector<18x8x60xf32>
    %13 = vector.shape_cast %12 : vector<18x8x60xf32> to vector<144x60xf32>
    %c2 = arith.constant 2 : index
    %c0_8 = arith.constant 0 : index
    %c0_9 = arith.constant 0 : index
    %14 = vector.load %arg2[%c2, %c0_8, %c0_9] : memref<3x60x144xf32, #tpu.memory_space<vmem>>, vector<1x60x144xf32>
    %15 = vector.shape_cast %14 : vector<1x60x144xf32> to vector<60x144xf32>
    %cst_10 = arith.constant dense<0.000000e+00> : vector<144x144xf32>
    %16 = tpu.matmul %13, %15, %cst_10 {dimension_numbers = #tpu.dot_dimension_numbers<[1], [0], [0], [1], [0, 0, 1, 1], [], []>} : vector<144x60xf32>, vector<60x144xf32>, vector<144x144xf32> -> vector<144x144xf32>
    %17 = arith.addf %11, %16 : vector<144x144xf32>
    %c0_11 = arith.constant 0 : index
    %c0_12 = arith.constant 0 : index
    %18 = vector.load %arg3[%c0_11, %c0_12] : memref<1x144xf32, #tpu.memory_space<vmem>>, vector<1x144xf32>
    %19 = vector.broadcast %18 : vector<1x144xf32> to vector<144x144xf32>
    %20 = arith.addf %17, %19 : vector<144x144xf32>
    %21 = vector.shape_cast %20 : vector<144x144xf32> to vector<9x16x144xf32>
    %22 = vector.extract_strided_slice %21 {offsets = [0, 0, 0], sizes = [9, 8, 144], strides = [1, 1, 1]} : vector<9x16x144xf32> to vector<9x8x144xf32>
    %23 = vector.extract_strided_slice %21 {offsets = [0, 8, 0], sizes = [9, 8, 144], strides = [1, 1, 1]} : vector<9x16x144xf32> to vector<9x8x144xf32>
    %24 = arith.maximumf %22, %23 : vector<9x8x144xf32>
    %25 = vector.shape_cast %24 : vector<9x8x144xf32> to vector<72x144xf32>
    %c0_13 = arith.constant 0 : index
    %c0_14 = arith.constant 0 : index
    %c0_15 = arith.constant 0 : index
    %26 = vector.load %arg4[%c0_13, %c0_14, %c0_15] : memref<2x144x72xf32, #tpu.memory_space<vmem>>, vector<1x144x72xf32>
    %27 = vector.shape_cast %26 : vector<1x144x72xf32> to vector<144x72xf32>
    %cst_16 = arith.constant dense<0.000000e+00> : vector<72x72xf32>
    %28 = tpu.matmul %25, %27, %cst_16 {dimension_numbers = #tpu.dot_dimension_numbers<[1], [0], [0], [1], [0, 0, 1, 1], [], []>} : vector<72x144xf32>, vector<144x72xf32>, vector<72x72xf32> -> vector<72x72xf32>
    %c1_17 = arith.constant 1 : index
    %c0_18 = arith.constant 0 : index
    %c0_19 = arith.constant 0 : index
    %29 = vector.load %arg4[%c1_17, %c0_18, %c0_19] : memref<2x144x72xf32, #tpu.memory_space<vmem>>, vector<1x144x72xf32>
    %30 = vector.shape_cast %29 : vector<1x144x72xf32> to vector<144x72xf32>
    %cst_20 = arith.constant dense<0.000000e+00> : vector<72x72xf32>
    %31 = tpu.matmul %25, %30, %cst_20 {dimension_numbers = #tpu.dot_dimension_numbers<[1], [0], [0], [1], [0, 0, 1, 1], [], []>} : vector<72x144xf32>, vector<144x72xf32>, vector<72x72xf32> -> vector<72x72xf32>
    %32 = arith.maximumf %28, %31 : vector<72x72xf32>
    %cst_21 = arith.constant 0.000000e+00 : f32
    %33 = vector.broadcast %cst_21 : f32 to vector<72x72xf32>
    %34 = arith.maximumf %32, %33 : vector<72x72xf32>
    %35 = vector.shape_cast %34 : vector<72x72xf32> to vector<9x8x72xf32>
    %36 = vector.extract_strided_slice %35 {offsets = [0, 0, 0], sizes = [5, 8, 72], strides = [1, 1, 1]} : vector<9x8x72xf32> to vector<5x8x72xf32>
    %37 = vector.shape_cast %36 : vector<5x8x72xf32> to vector<40x72xf32>
    %c0_22 = arith.constant 0 : index
    %c0_23 = arith.constant 0 : index
    %c0_24 = arith.constant 0 : index
    %38 = vector.load %arg5[%c0_22, %c0_23, %c0_24] : memref<5x72x50xf32, #tpu.memory_space<vmem>>, vector<1x72x50xf32>
    %39 = vector.shape_cast %38 : vector<1x72x50xf32> to vector<72x50xf32>
    %cst_25 = arith.constant dense<0.000000e+00> : vector<40x50xf32>
    %40 = tpu.matmul %37, %39, %cst_25 {dimension_numbers = #tpu.dot_dimension_numbers<[1], [0], [0], [1], [0, 0, 1, 1], [], []>} : vector<40x72xf32>, vector<72x50xf32>, vector<40x50xf32> -> vector<40x50xf32>
    %41 = vector.extract_strided_slice %35 {offsets = [1, 0, 0], sizes = [5, 8, 72], strides = [1, 1, 1]} : vector<9x8x72xf32> to vector<5x8x72xf32>
    %42 = vector.shape_cast %41 : vector<5x8x72xf32> to vector<40x72xf32>
    %c1_26 = arith.constant 1 : index
    %c0_27 = arith.constant 0 : index
    %c0_28 = arith.constant 0 : index
    %43 = vector.load %arg5[%c1_26, %c0_27, %c0_28] : memref<5x72x50xf32, #tpu.memory_space<vmem>>, vector<1x72x50xf32>
    %44 = vector.shape_cast %43 : vector<1x72x50xf32> to vector<72x50xf32>
    %cst_29 = arith.constant dense<0.000000e+00> : vector<40x50xf32>
    %45 = tpu.matmul %42, %44, %cst_29 {dimension_numbers = #tpu.dot_dimension_numbers<[1], [0], [0], [1], [0, 0, 1, 1], [], []>} : vector<40x72xf32>, vector<72x50xf32>, vector<40x50xf32> -> vector<40x50xf32>
    %46 = arith.addf %40, %45 : vector<40x50xf32>
    %47 = vector.extract_strided_slice %35 {offsets = [2, 0, 0], sizes = [5, 8, 72], strides = [1, 1, 1]} : vector<9x8x72xf32> to vector<5x8x72xf32>
    %48 = vector.shape_cast %47 : vector<5x8x72xf32> to vector<40x72xf32>
    %c2_30 = arith.constant 2 : index
    %c0_31 = arith.constant 0 : index
    %c0_32 = arith.constant 0 : index
    %49 = vector.load %arg5[%c2_30, %c0_31, %c0_32] : memref<5x72x50xf32, #tpu.memory_space<vmem>>, vector<1x72x50xf32>
    %50 = vector.shape_cast %49 : vector<1x72x50xf32> to vector<72x50xf32>
    %cst_33 = arith.constant dense<0.000000e+00> : vector<40x50xf32>
    %51 = tpu.matmul %48, %50, %cst_33 {dimension_numbers = #tpu.dot_dimension_numbers<[1], [0], [0], [1], [0, 0, 1, 1], [], []>} : vector<40x72xf32>, vector<72x50xf32>, vector<40x50xf32> -> vector<40x50xf32>
    %52 = arith.addf %46, %51 : vector<40x50xf32>
    %53 = vector.extract_strided_slice %35 {offsets = [3, 0, 0], sizes = [5, 8, 72], strides = [1, 1, 1]} : vector<9x8x72xf32> to vector<5x8x72xf32>
    %54 = vector.shape_cast %53 : vector<5x8x72xf32> to vector<40x72xf32>
    %c3 = arith.constant 3 : index
    %c0_34 = arith.constant 0 : index
    %c0_35 = arith.constant 0 : index
    %55 = vector.load %arg5[%c3, %c0_34, %c0_35] : memref<5x72x50xf32, #tpu.memory_space<vmem>>, vector<1x72x50xf32>
    %56 = vector.shape_cast %55 : vector<1x72x50xf32> to vector<72x50xf32>
    %cst_36 = arith.constant dense<0.000000e+00> : vector<40x50xf32>
    %57 = tpu.matmul %54, %56, %cst_36 {dimension_numbers = #tpu.dot_dimension_numbers<[1], [0], [0], [1], [0, 0, 1, 1], [], []>} : vector<40x72xf32>, vector<72x50xf32>, vector<40x50xf32> -> vector<40x50xf32>
    %58 = arith.addf %52, %57 : vector<40x50xf32>
    %59 = vector.extract_strided_slice %35 {offsets = [4, 0, 0], sizes = [5, 8, 72], strides = [1, 1, 1]} : vector<9x8x72xf32> to vector<5x8x72xf32>
    %60 = vector.shape_cast %59 : vector<5x8x72xf32> to vector<40x72xf32>
    %c4 = arith.constant 4 : index
    %c0_37 = arith.constant 0 : index
    %c0_38 = arith.constant 0 : index
    %61 = vector.load %arg5[%c4, %c0_37, %c0_38] : memref<5x72x50xf32, #tpu.memory_space<vmem>>, vector<1x72x50xf32>
    %62 = vector.shape_cast %61 : vector<1x72x50xf32> to vector<72x50xf32>
    %cst_39 = arith.constant dense<0.000000e+00> : vector<40x50xf32>
    %63 = tpu.matmul %60, %62, %cst_39 {dimension_numbers = #tpu.dot_dimension_numbers<[1], [0], [0], [1], [0, 0, 1, 1], [], []>} : vector<40x72xf32>, vector<72x50xf32>, vector<40x50xf32> -> vector<40x50xf32>
    %64 = arith.addf %58, %63 : vector<40x50xf32>
    %c0_40 = arith.constant 0 : index
    %c0_41 = arith.constant 0 : index
    %65 = vector.load %arg6[%c0_40, %c0_41] : memref<1x50xf32, #tpu.memory_space<vmem>>, vector<1x50xf32>
    %66 = vector.broadcast %65 : vector<1x50xf32> to vector<40x50xf32>
    %67 = arith.addf %64, %66 : vector<40x50xf32>
    %68 = vector.shape_cast %67 : vector<40x50xf32> to vector<5x8x50xf32>
    %69 = vector.extract_strided_slice %68 {offsets = [0, 0, 0], sizes = [4, 8, 50], strides = [1, 1, 1]} : vector<5x8x50xf32> to vector<4x8x50xf32>
    %70 = vector.shape_cast %69 : vector<4x8x50xf32> to vector<2x16x50xf32>
    %71 = vector.extract_strided_slice %70 {offsets = [0, 0, 0], sizes = [2, 8, 50], strides = [1, 1, 1]} : vector<2x16x50xf32> to vector<2x8x50xf32>
    %72 = vector.extract_strided_slice %70 {offsets = [0, 8, 0], sizes = [2, 8, 50], strides = [1, 1, 1]} : vector<2x16x50xf32> to vector<2x8x50xf32>
    %73 = arith.maximumf %71, %72 : vector<2x8x50xf32>
    %74 = vector.shape_cast %73 : vector<2x8x50xf32> to vector<16x50xf32>
    %c0_42 = arith.constant 0 : index
    %c0_43 = arith.constant 0 : index
    %c0_44 = arith.constant 0 : index
    %75 = vector.load %arg7[%c0_42, %c0_43, %c0_44] : memref<2x50x20xf32, #tpu.memory_space<vmem>>, vector<1x50x20xf32>
    %76 = vector.shape_cast %75 : vector<1x50x20xf32> to vector<50x20xf32>
    %cst_45 = arith.constant dense<0.000000e+00> : vector<16x20xf32>
    %77 = tpu.matmul %74, %76, %cst_45 {dimension_numbers = #tpu.dot_dimension_numbers<[1], [0], [0], [1], [0, 0, 1, 1], [], []>} : vector<16x50xf32>, vector<50x20xf32>, vector<16x20xf32> -> vector<16x20xf32>
    %c1_46 = arith.constant 1 : index
    %c0_47 = arith.constant 0 : index
    %c0_48 = arith.constant 0 : index
    %78 = vector.load %arg7[%c1_46, %c0_47, %c0_48] : memref<2x50x20xf32, #tpu.memory_space<vmem>>, vector<1x50x20xf32>
    %79 = vector.shape_cast %78 : vector<1x50x20xf32> to vector<50x20xf32>
    %cst_49 = arith.constant dense<0.000000e+00> : vector<16x20xf32>
    %80 = tpu.matmul %74, %79, %cst_49 {dimension_numbers = #tpu.dot_dimension_numbers<[1], [0], [0], [1], [0, 0, 1, 1], [], []>} : vector<16x50xf32>, vector<50x20xf32>, vector<16x20xf32> -> vector<16x20xf32>
    %81 = arith.maximumf %77, %80 : vector<16x20xf32>
    %cst_50 = arith.constant 0.000000e+00 : f32
    %82 = vector.broadcast %cst_50 : f32 to vector<16x20xf32>
    %83 = arith.maximumf %81, %82 : vector<16x20xf32>
    %c0_51 = arith.constant 0 : index
    %c0_52 = arith.constant 0 : index
    %84 = vector.load %arg9[%c0_51, %c0_52] : memref<1x10xf32, #tpu.memory_space<vmem>>, vector<1x10xf32>
    %85 = vector.extract_strided_slice %83 {offsets = [0, 0], sizes = [8, 20], strides = [1, 1]} : vector<16x20xf32> to vector<8x20xf32>
    %c0_53 = arith.constant 0 : index
    %c0_54 = arith.constant 0 : index
    %c0_55 = arith.constant 0 : index
    %86 = vector.load %arg8[%c0_53, %c0_54, %c0_55] : memref<2x20x10xf32, #tpu.memory_space<vmem>>, vector<1x20x10xf32>
    %87 = vector.shape_cast %86 : vector<1x20x10xf32> to vector<20x10xf32>
    %cst_56 = arith.constant dense<0.000000e+00> : vector<8x10xf32>
    %88 = tpu.matmul %85, %87, %cst_56 {dimension_numbers = #tpu.dot_dimension_numbers<[1], [0], [0], [1], [0, 0, 1, 1], [], []>} : vector<8x20xf32>, vector<20x10xf32>, vector<8x10xf32> -> vector<8x10xf32>
    %89 = vector.broadcast %84 : vector<1x10xf32> to vector<8x10xf32>
    %90 = arith.addf %89, %88 : vector<8x10xf32>
    %91 = vector.extract_strided_slice %83 {offsets = [8, 0], sizes = [8, 20], strides = [1, 1]} : vector<16x20xf32> to vector<8x20xf32>
    %c1_57 = arith.constant 1 : index
    %c0_58 = arith.constant 0 : index
    %c0_59 = arith.constant 0 : index
    %92 = vector.load %arg8[%c1_57, %c0_58, %c0_59] : memref<2x20x10xf32, #tpu.memory_space<vmem>>, vector<1x20x10xf32>
    %93 = vector.shape_cast %92 : vector<1x20x10xf32> to vector<20x10xf32>
    %cst_60 = arith.constant dense<0.000000e+00> : vector<8x10xf32>
    %94 = tpu.matmul %91, %93, %cst_60 {dimension_numbers = #tpu.dot_dimension_numbers<[1], [0], [0], [1], [0, 0, 1, 1], [], []>} : vector<8x20xf32>, vector<20x10xf32>, vector<8x10xf32> -> vector<8x10xf32>
    %95 = arith.addf %90, %94 : vector<8x10xf32>
    %cst_61 = arith.constant 0.000000e+00 : f32
    %96 = vector.broadcast %cst_61 : f32 to vector<8x10xf32>
    %97 = arith.maximumf %95, %96 : vector<8x10xf32>
    %c0_62 = arith.constant 0 : index
    %c0_63 = arith.constant 0 : index
    %98 = vector.load %arg10[%c0_62, %c0_63] : memref<10x12xf32, #tpu.memory_space<vmem>>, vector<10x12xf32>
    %cst_64 = arith.constant dense<0.000000e+00> : vector<8x12xf32>
    %99 = tpu.matmul %97, %98, %cst_64 {dimension_numbers = #tpu.dot_dimension_numbers<[1], [0], [0], [1], [0, 0, 1, 1], [], []>} : vector<8x10xf32>, vector<10x12xf32>, vector<8x12xf32> -> vector<8x12xf32>
    %c0_65 = arith.constant 0 : index
    %c0_66 = arith.constant 0 : index
    %100 = vector.load %arg11[%c0_65, %c0_66] : memref<1x12xf32, #tpu.memory_space<vmem>>, vector<1x12xf32>
    %101 = vector.broadcast %100 : vector<1x12xf32> to vector<8x12xf32>
    %102 = arith.addf %99, %101 : vector<8x12xf32>
    %c0_67 = arith.constant 0 : index
    %c0_68 = arith.constant 0 : index
    %103 = vector.load %arg12[%c0_67, %c0_68] : memref<8x12xf32, #tpu.memory_space<vmem>>, vector<8x12xf32>
    tpu.vector_store %arg12[%c0_67, %c0_68], %102 {strides = array<i32>} : memref<8x12xf32, #tpu.memory_space<vmem>>, vector<8x12xf32>,
    return
  }
  func.func @transform_0(%arg0: i32) -> (i32, i32, i32) {
    %c0_i32 = arith.constant 0 : i32
    %c0_i32_0 = arith.constant 0 : i32
    %c0_i32_1 = arith.constant 0 : i32
    return %c0_i32, %arg0, %c0_i32_0 : i32, i32, i32
  }
  func.func @transform_1(%arg0: i32) -> (i32, i32, i32) {
    %c0_i32 = arith.constant 0 : i32
    %c0_i32_0 = arith.constant 0 : i32
    %c0_i32_1 = arith.constant 0 : i32
    %c0_i32_2 = arith.constant 0 : i32
    return %c0_i32, %c0_i32_0, %c0_i32_1 : i32, i32, i32
  }
  func.func @transform_2(%arg0: i32) -> (i32, i32) {
    %c0_i32 = arith.constant 0 : i32
    %c0_i32_0 = arith.constant 0 : i32
    %c0_i32_1 = arith.constant 0 : i32
    return %c0_i32, %c0_i32_0 : i32, i32
  }
  func.func @transform_3(%arg0: i32) -> (i32, i32, i32) {
    %c0_i32 = arith.constant 0 : i32
    %c0_i32_0 = arith.constant 0 : i32
    %c0_i32_1 = arith.constant 0 : i32
    %c0_i32_2 = arith.constant 0 : i32
    return %c0_i32, %c0_i32_0, %c0_i32_1 : i32, i32, i32
  }
  func.func @transform_4(%arg0: i32) -> (i32, i32, i32) {
    %c0_i32 = arith.constant 0 : i32
    %c0_i32_0 = arith.constant 0 : i32
    %c0_i32_1 = arith.constant 0 : i32
    %c0_i32_2 = arith.constant 0 : i32
    return %c0_i32, %c0_i32_0, %c0_i32_1 : i32, i32, i32
  }
  func.func @transform_5(%arg0: i32) -> (i32, i32) {
    %c0_i32 = arith.constant 0 : i32
    %c0_i32_0 = arith.constant 0 : i32
    %c0_i32_1 = arith.constant 0 : i32
    return %c0_i32, %c0_i32_0 : i32, i32
  }
  func.func @transform_6(%arg0: i32) -> (i32, i32, i32) {
    %c0_i32 = arith.constant 0 : i32
    %c0_i32_0 = arith.constant 0 : i32
    %c0_i32_1 = arith.constant 0 : i32
    %c0_i32_2 = arith.constant 0 : i32
    return %c0_i32, %c0_i32_0, %c0_i32_1 : i32, i32, i32
  }
  func.func @transform_7(%arg0: i32) -> (i32, i32, i32) {
    %c0_i32 = arith.constant 0 : i32
    %c0_i32_0 = arith.constant 0 : i32
    %c0_i32_1 = arith.constant 0 : i32
    %c0_i32_2 = arith.constant 0 : i32
    return %c0_i32, %c0_i32_0, %c0_i32_1 : i32, i32, i32
  }
  func.func @transform_8(%arg0: i32) -> (i32, i32) {
    %c0_i32 = arith.constant 0 : i32
    %c0_i32_0 = arith.constant 0 : i32
    %c0_i32_1 = arith.constant 0 : i32
    return %c0_i32, %c0_i32_0 : i32, i32
  }
  func.func @transform_9(%arg0: i32) -> (i32, i32) {
    %c0_i32 = arith.constant 0 : i32
    %c0_i32_0 = arith.constant 0 : i32
    %c0_i32_1 = arith.constant 0 : i32
    return %c0_i32, %c0_i32_0 : i32, i32
  }
  func.func @transform_10(%arg0: i32) -> (i32, i32) {
    %c0_i32 = arith.constant 0 : i32
    %c0_i32_0 = arith.constant 0 : i32
    %c0_i32_1 = arith.constant 0 : i32
    return %c0_i32, %c0_i32_0 : i32, i32
  }
  func.func @transform_11(%arg0: i32) -> (i32, i32) {
    %c0_i32 = arith.constant 0 : i32
    %c0_i32_0 = arith.constant 0 : i32
    return %arg0, %c0_i32 : i32, i32
  }
}

</mosaic_0001>

<llo_original>
// kernel: conv_regressor_forward.1
$region0: #{conv_regressor_forward.1}
  #allocation0 [shape = 'u32[]', space=smem, size = 0x4, offset = 0x4, fixed_abs, tag = 'smem constant byte address 0x4 - core index']
  #allocation1 [shape = 'u32[144,128]{1,0:T(1,128)}', space=vmem, size = 0x12000, scoped, tag = 'internal scratch']
  %s0 = inlined_call_operand.vmem [shape: f32[20,16,60], index: 0, kind: input, shape index: {}]
  %s1 = inlined_call_operand.vmem [shape: f32[3,60,144], index: 1, kind: input, shape index: {}]
  %s2 = inlined_call_operand.vmem [shape: f32[1,144], index: 2, kind: input, shape index: {}]
  %s3 = inlined_call_operand.vmem [shape: f32[2,144,72], index: 3, kind: input, shape index: {}]
  %s4 = inlined_call_operand.vmem [shape: f32[5,72,50], index: 4, kind: input, shape index: {}]
  %s5 = inlined_call_operand.vmem [shape: f32[1,50], index: 5, kind: input, shape index: {}]
  %s6 = inlined_call_operand.vmem [shape: f32[2,50,20], index: 6, kind: input, shape index: {}]
  %s7 = inlined_call_operand.vmem [shape: f32[2,20,10], index: 7, kind: input, shape index: {}]
  %s8 = inlined_call_operand.vmem [shape: f32[1,10], index: 8, kind: input, shape index: {}]
  %s9 = inlined_call_operand.vmem [shape: f32[10,12], index: 9, kind: input, shape index: {}]
  %s10 = inlined_call_operand.vmem [shape: f32[1,12], index: 10, kind: input, shape index: {}]
  %s11 = inlined_call_operand.vmem [shape: f32[16,12], index: 11, kind: output, shape index: {}]
  %s12 = sld [smem:[#allocation0]]
  $region115: #{conv_regressor_forward.1} parent=0
    _
  %s14 = ssub.s32 1, %s12
  %s15 = scalar_select 0, %s14, %s12
  $region1: #{conv_regressor_forward.1} parent=0
    #allocation2 [shape = 'u8[163840]{0}', space=vmem, size = 0x28000, scoped, tag = 'input window, operand 0']
    loop: start=0, step=1, limit=4
    $region2: #{conv_regressor_forward.1} parent=1 // loop_pre_header
      _
    $region3: #{conv_regressor_forward.1} parent=1 // loop_header
      %s17 = sphi 0, %s21
      %p18 = scmp.ge.s32.totalorder %s17, 4
      %s27 = sphi 0, %s29
      %s30 = sphi 0, %s27
      %s31 = sphi 0, %s30
      %s47 = sphi 0, %s31
      %s51 = sphi 0, %s51
      %s53 = sphi 0, %s51
      %s54 = sphi 0, %s53
      %s68 = sphi 0, %s54
      %s72 = sphi 0, %s72
      %s74 = sphi 0, %s72
      %s75 = sphi 0, %s74
      %s89 = sphi 0, %s75
      %s93 = sphi 0, %s93
      %s95 = sphi 0, %s93
      %s96 = sphi 0, %s95
      %s110 = sphi 0, %s96
      %s114 = sphi 0, %s114
      %s116 = sphi 0, %s114
      %s117 = sphi 0, %s116
      %s131 = sphi 0, %s117
      %s135 = sphi 0, %s135
      %s137 = sphi 0, %s135
      %s138 = sphi 0, %s137
      %s152 = sphi 0, %s138
      %s156 = sphi 0, %s156
      %s158 = sphi 0, %s156
      %s159 = sphi 0, %s158
      %s173 = sphi 0, %s159
      %s177 = sphi 0, %s177
      %s179 = sphi 0, %s177
      %s180 = sphi 0, %s179
      %s194 = sphi 0, %s180
      %s198 = sphi 0, %s198
      %s200 = sphi 0, %s198
      %s201 = sphi 0, %s200
      %s215 = sphi 0, %s201
      %s219 = sphi 0, %s219
      %s221 = sphi 0, %s219
      %s222 = sphi 0, %s221
      %s236 = sphi 0, %s222
      %s240 = sphi 0, %s240
      %s242 = sphi 0, %s240
      %s243 = sphi 0, %s242
      %s257 = sphi 0, %s243
      %s263 = sphi 0, %s265
      %s266 = sphi 0, %s263
      %s267 = sphi 0, %s266
      %s283 = sphi 0, %s267
    $region4: #{conv_regressor_forward.1} parent=1 // loop_header_branch
      %20 = sbr.rel (%p18) target = $region8
    $region5: #{conv_regressor_forward.1} parent=1 // loop_body
      %s22 = ssub.s32 %s17, 1
      %s23 = ssub.s32 %s17, 2
      %s24 = sadd.s32 %s17, 1
      %s25 = ssub.s32 %s17, %s24
      %p26 = scmp.eq.s32.totalorder %s25, 0
      %s28 = sadd.s32 %s27, 1
      %s29 = scalar_select %p26, %s27, %s28
      %p32 = pneg %p26
      %p33 = scmp.eq.s32.totalorder %s17, 1
      %p34 = por %p32, %p33
      %p35 = scmp.ne.s32.totalorder %s27, %s30
      %p36 = scmp.eq.s32.totalorder %s17, 0
      %p37 = por %p35, %p36
      %p38 = scmp.ne.s32.totalorder %s27, %s30
      %p39 = scmp.eq.s32.totalorder %s22, 1
      %p40 = por %p38, %p39
      %p41 = scmp.ne.s32.totalorder %s30, %s31
      %p42 = scmp.eq.s32.totalorder %s22, 0
      %p43 = por %p41, %p42
      %p44 = scmp.ne.s32.totalorder %s30, %s31
      %p45 = scmp.eq.s32.totalorder %s23, 1
      %p46 = por %p44, %p45
      %p48 = scmp.ne.s32.totalorder %s31, %s47
      %p49 = scmp.eq.s32.totalorder %s23, 0
      %p50 = por %p48, %p49
      %s52 = sadd.s32 %s51, 1
      %p55 = scmp.eq.s32.totalorder %s17, 1
      %p56 = scmp.ne.s32.totalorder %s51, %s53
      %p57 = scmp.eq.s32.totalorder %s17, 0
      %p58 = por %p56, %p57
      %p59 = scmp.ne.s32.totalorder %s51, %s53
      %p60 = scmp.eq.s32.totalorder %s22, 1
      %p61 = por %p59, %p60
      %p62 = scmp.ne.s32.totalorder %s53, %s54
      %p63 = scmp.eq.s32.totalorder %s22, 0
      %p64 = por %p62, %p63
      %p65 = scmp.ne.s32.totalorder %s53, %s54
      %p66 = scmp.eq.s32.totalorder %s23, 1
      %p67 = por %p65, %p66
      %p69 = scmp.ne.s32.totalorder %s54, %s68
      %p70 = scmp.eq.s32.totalorder %s23, 0
      %p71 = por %p69, %p70
      %s73 = sadd.s32 %s72, 1
      %p76 = scmp.eq.s32.totalorder %s17, 1
      %p77 = scmp.ne.s32.totalorder %s72, %s74
      %p78 = scmp.eq.s32.totalorder %s17, 0
      %p79 = por %p77, %p78
      %p80 = scmp.ne.s32.totalorder %s72, %s74
      %p81 = scmp.eq.s32.totalorder %s22, 1
      %p82 = por %p80, %p81
      %p83 = scmp.ne.s32.totalorder %s74, %s75
      %p84 = scmp.eq.s32.totalorder %s22, 0
      %p85 = por %p83, %p84
      %p86 = scmp.ne.s32.totalorder %s74, %s75
      %p87 = scmp.eq.s32.totalorder %s23, 1
      %p88 = por %p86, %p87
      %p90 = scmp.ne.s32.totalorder %s75, %s89
      %p91 = scmp.eq.s32.totalorder %s23, 0
      %p92 = por %p90, %p91
      %s94 = sadd.s32 %s93, 1
      %p97 = scmp.eq.s32.totalorder %s17, 1
      %p98 = scmp.ne.s32.totalorder %s93, %s95
      %p99 = scmp.eq.s32.totalorder %s17, 0
      %p100 = por %p98, %p99
      %p101 = scmp.ne.s32.totalorder %s93, %s95
      %p102 = scmp.eq.s32.totalorder %s22, 1
      %p103 = por %p101, %p102
      %p104 = scmp.ne.s32.totalorder %s95, %s96
      %p105 = scmp.eq.s32.totalorder %s22, 0
      %p106 = por %p104, %p105
      %p107 = scmp.ne.s32.totalorder %s95, %s96
      %p108 = scmp.eq.s32.totalorder %s23, 1
      %p109 = por %p107, %p108
      %p111 = scmp.ne.s32.totalorder %s96, %s110
      %p112 = scmp.eq.s32.totalorder %s23, 0
      %p113 = por %p111, %p112
      %s115 = sadd.s32 %s114, 1
      %p118 = scmp.eq.s32.totalorder %s17, 1
      %p119 = scmp.ne.s32.totalorder %s114, %s116
      %p120 = scmp.eq.s32.totalorder %s17, 0
      %p121 = por %p119, %p120
      %p122 = scmp.ne.s32.totalorder %s114, %s116
      %p123 = scmp.eq.s32.totalorder %s22, 1
      %p124 = por %p122, %p123
      %p125 = scmp.ne.s32.totalorder %s116, %s117
      %p126 = scmp.eq.s32.totalorder %s22, 0
      %p127 = por %p125, %p126
      %p128 = scmp.ne.s32.totalorder %s116, %s117
      %p129 = scmp.eq.s32.totalorder %s23, 1
      %p130 = por %p128, %p129
      %p132 = scmp.ne.s32.totalorder %s117, %s131
      %p133 = scmp.eq.s32.totalorder %s23, 0
      %p134 = por %p132, %p133
      %s136 = sadd.s32 %s135, 1
      %p139 = scmp.eq.s32.totalorder %s17, 1
      %p140 = scmp.ne.s32.totalorder %s135, %s137
      %p141 = scmp.eq.s32.totalorder %s17, 0
      %p142 = por %p140, %p141
      %p143 = scmp.ne.s32.totalorder %s135, %s137
      %p144 = scmp.eq.s32.totalorder %s22, 1
      %p145 = por %p143, %p144
      %p146 = scmp.ne.s32.totalorder %s137, %s138
      %p147 = scmp.eq.s32.totalorder %s22, 0
      %p148 = por %p146, %p147
      %p149 = scmp.ne.s32.totalorder %s137, %s138
      %p150 = scmp.eq.s32.totalorder %s23, 1
      %p151 = por %p149, %p150
      %p153 = scmp.ne.s32.totalorder %s138, %s152
      %p154 = scmp.eq.s32.totalorder %s23, 0
      %p155 = por %p153, %p154
      %s157 = sadd.s32 %s156, 1
      %p160 = scmp.eq.s32.totalorder %s17, 1
      %p161 = scmp.ne.s32.totalorder %s156, %s158
      %p162 = scmp.eq.s32.totalorder %s17, 0
      %p163 = por %p161, %p162
      %p164 = scmp.ne.s32.totalorder %s156, %s158
      %p165 = scmp.eq.s32.totalorder %s22, 1
      %p166 = por %p164, %p165
      %p167 = scmp.ne.s32.totalorder %s158, %s159
      %p168 = scmp.eq.s32.totalorder %s22, 0
      %p169 = por %p167, %p168
      %p170 = scmp.ne.s32.totalorder %s158, %s159
      %p171 = scmp.eq.s32.totalorder %s23, 1
      %p172 = por %p170, %p171
      %p174 = scmp.ne.s32.totalorder %s159, %s173
      %p175 = scmp.eq.s32.totalorder %s23, 0
      %p176 = por %p174, %p175
      %s178 = sadd.s32 %s177, 1
      %p181 = scmp.eq.s32.totalorder %s17, 1
      %p182 = scmp.ne.s32.totalorder %s177, %s179
      %p183 = scmp.eq.s32.totalorder %s17, 0
      %p184 = por %p182, %p183
      %p185 = scmp.ne.s32.totalorder %s177, %s179
      %p186 = scmp.eq.s32.totalorder %s22, 1
      %p187 = por %p185, %p186
      %p188 = scmp.ne.s32.totalorder %s179, %s180
      %p189 = scmp.eq.s32.totalorder %s22, 0
      %p190 = por %p188, %p189
      %p191 = scmp.ne.s32.totalorder %s179, %s180
      %p192 = scmp.eq.s32.totalorder %s23, 1
      %p193 = por %p191, %p192
      %p195 = scmp.ne.s32.totalorder %s180, %s194
      %p196 = scmp.eq.s32.totalorder %s23, 0
      %p197 = por %p195, %p196
      %s199 = sadd.s32 %s198, 1
      %p202 = scmp.eq.s32.totalorder %s17, 1
      %p203 = scmp.ne.s32.totalorder %s198, %s200
      %p204 = scmp.eq.s32.totalorder %s17, 0
      %p205 = por %p203, %p204
      %p206 = scmp.ne.s32.totalorder %s198, %s200
      %p207 = scmp.eq.s32.totalorder %s22, 1
      %p208 = por %p206, %p207
      %p209 = scmp.ne.s32.totalorder %s200, %s201
      %p210 = scmp.eq.s32.totalorder %s22, 0
      %p211 = por %p209, %p210
      %p212 = scmp.ne.s32.totalorder %s200, %s201
      %p213 = scmp.eq.s32.totalorder %s23, 1
      %p214 = por %p212, %p213
      %p216 = scmp.ne.s32.totalorder %s201, %s215
      %p217 = scmp.eq.s32.totalorder %s23, 0
      %p218 = por %p216, %p217
      %s220 = sadd.s32 %s219, 1
      %p223 = scmp.eq.s32.totalorder %s17, 1
      %p224 = scmp.ne.s32.totalorder %s219, %s221
      %p225 = scmp.eq.s32.totalorder %s17, 0
      %p226 = por %p224, %p225
      %p227 = scmp.ne.s32.totalorder %s219, %s221
      %p228 = scmp.eq.s32.totalorder %s22, 1
      %p229 = por %p227, %p228
      %p230 = scmp.ne.s32.totalorder %s221, %s222
      %p231 = scmp.eq.s32.totalorder %s22, 0
      %p232 = por %p230, %p231
      %p233 = scmp.ne.s32.totalorder %s221, %s222
      %p234 = scmp.eq.s32.totalorder %s23, 1
      %p235 = por %p233, %p234
      %p237 = scmp.ne.s32.totalorder %s222, %s236
      %p238 = scmp.eq.s32.totalorder %s23, 0
      %p239 = por %p237, %p238
      %s241 = sadd.s32 %s240, 1
      %p244 = scmp.eq.s32.totalorder %s17, 1
      %p245 = scmp.ne.s32.totalorder %s240, %s242
      %p246 = scmp.eq.s32.totalorder %s17, 0
      %p247 = por %p245, %p246
      %p248 = scmp.ne.s32.totalorder %s240, %s242
      %p249 = scmp.eq.s32.totalorder %s22, 1
      %p250 = por %p248, %p249
      %p251 = scmp.ne.s32.totalorder %s242, %s243
      %p252 = scmp.eq.s32.totalorder %s22, 0
      %p253 = por %p251, %p252
      %p254 = scmp.ne.s32.totalorder %s242, %s243
      %p255 = scmp.eq.s32.totalorder %s23, 1
      %p256 = por %p254, %p255
      %p258 = scmp.ne.s32.totalorder %s243, %s257
      %p259 = scmp.eq.s32.totalorder %s23, 0
      %p260 = por %p258, %p259
      %s261 = ssub.s32 %s17, %s24
      %p262 = scmp.eq.s32.totalorder %s261, 0
      %s264 = sadd.s32 %s263, 1
      %s265 = scalar_select %p262, %s263, %s264
      %p268 = pneg %p262
      %p269 = scmp.eq.s32.totalorder %s17, 1
      %p270 = por %p268, %p269
      %p271 = scmp.ne.s32.totalorder %s263, %s266
      %p272 = scmp.eq.s32.totalorder %s17, 0
      %p273 = por %p271, %p272
      %p274 = scmp.ne.s32.totalorder %s263, %s266
      %p275 = scmp.eq.s32.totalorder %s22, 1
      %p276 = por %p274, %p275
      %p277 = scmp.ne.s32.totalorder %s266, %s267
      %p278 = scmp.eq.s32.totalorder %s22, 0
      %p279 = por %p277, %p278
      %p280 = scmp.ne.s32.totalorder %s266, %s267
      %p281 = scmp.eq.s32.totalorder %s23, 1
      %p282 = por %p280, %p281
      %p284 = scmp.ne.s32.totalorder %s267, %s283
      %p285 = scmp.eq.s32.totalorder %s23, 0
      %p286 = por %p284, %p285
      %p287 = scmp.le.s32.totalorder 1, %s17
      %p288 = scmp.lt.s32.totalorder %s17, 3
      %p289 = pnand %p287, %p288
      %p290 = pneg %p289
      // Predicated region
      $region9: #{conv_regressor_forward.1} parent=5 // pred_check
        _
      $region10: #{conv_regressor_forward.1} parent=5 // pred_check_branch
        %292 = sbr.rel (%p289) target = $region12
      $region11: #{conv_regressor_forward.1} parent=5 // pred_region
        %s293 = ssub.s32 %s17, 1
        // Predicated region
        $region13: #{conv_regressor_forward.1} parent=11 // pred_check
          %p294 = pneg %p64
        $region14: #{conv_regressor_forward.1} parent=11 // pred_check_branch
          %296 = sbr.rel (%p294) target = $region16
        $region15: #{conv_regressor_forward.1} parent=11 // pred_region
          _
        $region16: #{conv_regressor_forward.1} parent=11 // pred_fallthru
          _
        // Predicated region
        $region17: #{conv_regressor_forward.1} parent=11 // pred_check
          %p297 = pneg %p85
        $region18: #{conv_regressor_forward.1} parent=11 // pred_check_branch
          %299 = sbr.rel (%p297) target = $region20
        $region19: #{conv_regressor_forward.1} parent=11 // pred_region
          _
        $region20: #{conv_regressor_forward.1} parent=11 // pred_fallthru
          _
        // Predicated region
        $region21: #{conv_regressor_forward.1} parent=11 // pred_check
          %p300 = pneg %p106
        $region22: #{conv_regressor_forward.1} parent=11 // pred_check_branch
          %302 = sbr.rel (%p300) target = $region24
        $region23: #{conv_regressor_forward.1} parent=11 // pred_region
          _
        $region24: #{conv_regressor_forward.1} parent=11 // pred_fallthru
          _
        // Predicated region
        $region25: #{conv_regressor_forward.1} parent=11 // pred_check
          %p303 = pneg %p127
        $region26: #{conv_regressor_forward.1} parent=11 // pred_check_branch
          %305 = sbr.rel (%p303) target = $region28
        $region27: #{conv_regressor_forward.1} parent=11 // pred_region
          _
        $region28: #{conv_regressor_forward.1} parent=11 // pred_fallthru
          _
        // Predicated region
        $region29: #{conv_regressor_forward.1} parent=11 // pred_check
          %p306 = pneg %p148
        $region30: #{conv_regressor_forward.1} parent=11 // pred_check_branch
          %308 = sbr.rel (%p306) target = $region32
        $region31: #{conv_regressor_forward.1} parent=11 // pred_region
          _
        $region32: #{conv_regressor_forward.1} parent=11 // pred_fallthru
          _
        // Predicated region
        $region33: #{conv_regressor_forward.1} parent=11 // pred_check
          %p309 = pneg %p169
        $region34: #{conv_regressor_forward.1} parent=11 // pred_check_branch
          %311 = sbr.rel (%p309) target = $region36
        $region35: #{conv_regressor_forward.1} parent=11 // pred_region
          _
        $region36: #{conv_regressor_forward.1} parent=11 // pred_fallthru
          _
        // Predicated region
        $region37: #{conv_regressor_forward.1} parent=11 // pred_check
          %p312 = pneg %p190
        $region38: #{conv_regressor_forward.1} parent=11 // pred_check_branch
          %314 = sbr.rel (%p312) target = $region40
        $region39: #{conv_regressor_forward.1} parent=11 // pred_region
          _
        $region40: #{conv_regressor_forward.1} parent=11 // pred_fallthru
          _
        // Predicated region
        $region41: #{conv_regressor_forward.1} parent=11 // pred_check
          %p315 = pneg %p211
        $region42: #{conv_regressor_forward.1} parent=11 // pred_check_branch
          %317 = sbr.rel (%p315) target = $region44
        $region43: #{conv_regressor_forward.1} parent=11 // pred_region
          _
        $region44: #{conv_regressor_forward.1} parent=11 // pred_fallthru
          _
        // Predicated region
        $region45: #{conv_regressor_forward.1} parent=11 // pred_check
          %p318 = pneg %p232
        $region46: #{conv_regressor_forward.1} parent=11 // pred_check_branch
          %320 = sbr.rel (%p318) target = $region48
        $region47: #{conv_regressor_forward.1} parent=11 // pred_region
          _
        $region48: #{conv_regressor_forward.1} parent=11 // pred_fallthru
          _
        // Predicated region
        $region49: #{conv_regressor_forward.1} parent=11 // pred_check
          %p321 = pneg %p253
        $region50: #{conv_regressor_forward.1} parent=11 // pred_check_branch
          %323 = sbr.rel (%p321) target = $region52
        $region51: #{conv_regressor_forward.1} parent=11 // pred_region
          _
        $region52: #{conv_regressor_forward.1} parent=11 // pred_fallthru
          _
      $region12: #{conv_regressor_forward.1} parent=5 // pred_fallthru
        _
      %p324 = scmp.lt.s32.totalorder %s17, 2
      // Predicated region
      $region53: #{conv_regressor_forward.1} parent=5 // pred_check
        %p325 = pneg %p324
      $region54: #{conv_regressor_forward.1} parent=5 // pred_check_branch
        %327 = sbr.rel (%p325) target = $region56
      $region55: #{conv_regressor_forward.1} parent=5 // pred_region
        // Predicated region
        $region57: #{conv_regressor_forward.1} parent=55 // pred_check
          %p328 = pneg %p37
        $region58: #{conv_regressor_forward.1} parent=55 // pred_check_branch
          %330 = sbr.rel (%p328) target = $region60
        $region59: #{conv_regressor_forward.1} parent=55 // pred_region
          %s331 = sand.u32 %s27, 1
          %s332 = sand.u32 %s27, 1
          %s333 = smul.addr %s332, 160
          %s334 = scalar_lea.vmem [#allocation2], %s333
          %s335 = smul.addr %s17, 8
          %s336 = scalar_lea.vmem %s0, %s335
          // Predicated region
          $region61: #{conv_regressor_forward.1} parent=59 // pred_check
            _
          $region62: #{conv_regressor_forward.1} parent=59 // pred_check_branch
            %338 = sbr.rel (0) target = $region64
          $region63: #{conv_regressor_forward.1} parent=59 // pred_region
            // Predicated region
            $region65: #{conv_regressor_forward.1} parent=63 // pred_check
              _
            $region66: #{conv_regressor_forward.1} parent=63 // pred_check_branch
              %340 = sbr.rel (0) target = $region68
            $region67: #{conv_regressor_forward.1} parent=63 // pred_region
              // Predicated region
              $region80: #{conv_regressor_forward.1} parent=67 // pred_check
                _
              $region81: #{conv_regressor_forward.1} parent=67 // pred_check_branch
                %393 = sbr.rel (0) target = $region83
              $region82: #{conv_regressor_forward.1} parent=67 // pred_region
                loop: start=0, step=1, limit=1
                $region84: #{conv_regressor_forward.1} parent=82 // loop_pre_header
                  _
                $region85: #{conv_regressor_forward.1} parent=82 // loop_header
                  %s395 = sphi 0, %s399
                  %p396 = scmp.ge.s32.totalorder %s395, 1
                  %s400 = sphi %s336, %s336
                  %s401 = sphi %s334, %s334
                $region86: #{conv_regressor_forward.1} parent=82 // loop_header_branch
                  %398 = sbr.rel (%p396) target = $region90
                $region87: #{conv_regressor_forward.1} parent=82 // loop_body
                  %v402 = vld [vmem:[%s400] sm:$0xff]
                  %403 = vst [vmem:[%s401] sm:$0xff] %v402
                  %v404 = vld [vmem:[%s400 + $0x10] sm:$0xff]
                  %405 = vst [vmem:[%s401 + $0x8] sm:$0xff] %v404
                  %v406 = vld [vmem:[%s400 + $0x20] sm:$0xff]
                  %407 = vst [vmem:[%s401 + $0x10] sm:$0xff] %v406
                  %v408 = vld [vmem:[%s400 + $0x30] sm:$0xff]
                  %409 = vst [vmem:[%s401 + $0x18] sm:$0xff] %v408
                  %v410 = vld [vmem:[%s400 + $0x40] sm:$0xff]
                  %411 = vst [vmem:[%s401 + $0x20] sm:$0xff] %v410
                  %v412 = vld [vmem:[%s400 + $0x50] sm:$0xff]
                  %413 = vst [vmem:[%s401 + $0x28] sm:$0xff] %v412
                  %v414 = vld [vmem:[%s400 + $0x60] sm:$0xff]
                  %415 = vst [vmem:[%s401 + $0x30] sm:$0xff] %v414
                  %v416 = vld [vmem:[%s400 + $0x70] sm:$0xff]
                  %417 = vst [vmem:[%s401 + $0x38] sm:$0xff] %v416
                  %v418 = vld [vmem:[%s400 + $0x80] sm:$0xff]
                  %419 = vst [vmem:[%s401 + $0x40] sm:$0xff] %v418
                  %v420 = vld [vmem:[%s400 + $0x90] sm:$0xff]
                  %421 = vst [vmem:[%s401 + $0x48] sm:$0xff] %v420
                  %v422 = vld [vmem:[%s400 + $0xa0] sm:$0xff]
                  %423 = vst [vmem:[%s401 + $0x50] sm:$0xff] %v422
                  %v424 = vld [vmem:[%s400 + $0xb0] sm:$0xff]
                  %425 = vst [vmem:[%s401 + $0x58] sm:$0xff] %v424
                  %v426 = vld [vmem:[%s400 + $0xc0] sm:$0xff]
                  %427 = vst [vmem:[%s401 + $0x60] sm:$0xff] %v426
                  %v428 = vld [vmem:[%s400 + $0xd0] sm:$0xff]
                  %429 = vst [vmem:[%s401 + $0x68] sm:$0xff] %v428
                  %v430 = vld [vmem:[%s400 + $0xe0] sm:$0xff]
                  %431 = vst [vmem:[%s401 + $0x70] sm:$0xff] %v430
                  %v432 = vld [vmem:[%s400 + $0xf0] sm:$0xff]
                  %433 = vst [vmem:[%s401 + $0x78] sm:$0xff] %v432
                  %v434 = vld [vmem:[%s400 + $0x100] sm:$0xff]
                  %435 = vst [vmem:[%s401 + $0x80] sm:$0xff] %v434
                  %v436 = vld [vmem:[%s400 + $0x110] sm:$0xff]
                  %437 = vst [vmem:[%s401 + $0x88] sm:$0xff] %v436
                  %v438 = vld [vmem:[%s400 + $0x120] sm:$0xff]
                  %439 = vst [vmem:[%s401 + $0x90] sm:$0xff] %v438
                  %v440 = vld [vmem:[%s400 + $0x130] sm:$0xff]
                  %441 = vst [vmem:[%s401 + $0x98] sm:$0xff] %v440
                $region88: #{conv_regressor_forward.1} parent=82 // loop_footer
                  %s399 = sadd.s32 1, %s395
                $region89: #{conv_regressor_forward.1} parent=82 // loop_footer_branch
                  %394 = sbr.rel target = $region85
                $region90: #{conv_regressor_forward.1} parent=82 // loop_exit
                  _
              $region83: #{conv_regressor_forward.1} parent=67 // pred_fallthru
                _
              // Predicated region
              $region91: #{conv_regressor_forward.1} parent=67 // pred_check
                _
              $region92: #{conv_regressor_forward.1} parent=67 // pred_check_branch
                %443 = sbr.rel target = $region94
              $region93: #{conv_regressor_forward.1} parent=67 // pred_region
                _
              $region94: #{conv_regressor_forward.1} parent=67 // pred_fallthru
                _
            $region68: #{conv_regressor_forward.1} parent=63 // pred_fallthru
              _
            // Predicated region
            $region69: #{conv_regressor_forward.1} parent=63 // pred_check
              _
            $region70: #{conv_regressor_forward.1} parent=63 // pred_check_branch
              %342 = sbr.rel target = $region72
            $region71: #{conv_regressor_forward.1} parent=63 // pred_region
              loop: start=0, step=1, limit=1
              $region73: #{conv_regressor_forward.1} parent=71 // loop_pre_header
                _
              $region74: #{conv_regressor_forward.1} parent=71 // loop_header
                %s345 = sphi 0, %s349
                %p346 = scmp.ge.s32.totalorder %s345, 1
                %s350 = sphi %s336, %s336
                %s351 = sphi %s334, %s334
              $region75: #{conv_regressor_forward.1} parent=71 // loop_header_branch
                %348 = sbr.rel (%p346) target = $region79
              $region76: #{conv_regressor_forward.1} parent=71 // loop_body
                %v352 = vld [vmem:[%s350] sm:$0xff]
                %353 = vst [vmem:[%s351] sm:$0xff] %v352
                %v354 = vld [vmem:[%s350 + $0x10] sm:$0xff]
                %355 = vst [vmem:[%s351 + $0x8] sm:$0xff] %v354
                %v356 = vld [vmem:[%s350 + $0x20] sm:$0xff]
                %357 = vst [vmem:[%s351 + $0x10] sm:$0xff] %v356
                %v358 = vld [vmem:[%s350 + $0x30] sm:$0xff]
                %359 = vst [vmem:[%s351 + $0x18] sm:$0xff] %v358
                %v360 = vld [vmem:[%s350 + $0x40] sm:$0xff]
                %361 = vst [vmem:[%s351 + $0x20] sm:$0xff] %v360
                %v362 = vld [vmem:[%s350 + $0x50] sm:$0xff]
                %363 = vst [vmem:[%s351 + $0x28] sm:$0xff] %v362
                %v364 = vld [vmem:[%s350 + $0x60] sm:$0xff]
                %365 = vst [vmem:[%s351 + $0x30] sm:$0xff] %v364
                %v366 = vld [vmem:[%s350 + $0x70] sm:$0xff]
                %367 = vst [vmem:[%s351 + $0x38] sm:$0xff] %v366
                %v368 = vld [vmem:[%s350 + $0x80] sm:$0xff]
                %369 = vst [vmem:[%s351 + $0x40] sm:$0xff] %v368
                %v370 = vld [vmem:[%s350 + $0x90] sm:$0xff]
                %371 = vst [vmem:[%s351 + $0x48] sm:$0xff] %v370
                %v372 = vld [vmem:[%s350 + $0xa0] sm:$0xff]
                %373 = vst [vmem:[%s351 + $0x50] sm:$0xff] %v372
                %v374 = vld [vmem:[%s350 + $0xb0] sm:$0xff]
                %375 = vst [vmem:[%s351 + $0x58] sm:$0xff] %v374
                %v376 = vld [vmem:[%s350 + $0xc0] sm:$0xff]
                %377 = vst [vmem:[%s351 + $0x60] sm:$0xff] %v376
                %v378 = vld [vmem:[%s350 + $0xd0] sm:$0xff]
                %379 = vst [vmem:[%s351 + $0x68] sm:$0xff] %v378
                %v380 = vld [vmem:[%s350 + $0xe0] sm:$0xff]
                %381 = vst [vmem:[%s351 + $0x70] sm:$0xff] %v380
                %v382 = vld [vmem:[%s350 + $0xf0] sm:$0xff]
                %383 = vst [vmem:[%s351 + $0x78] sm:$0xff] %v382
                %v384 = vld [vmem:[%s350 + $0x100] sm:$0xff]
                %385 = vst [vmem:[%s351 + $0x80] sm:$0xff] %v384
                %v386 = vld [vmem:[%s350 + $0x110] sm:$0xff]
                %387 = vst [vmem:[%s351 + $0x88] sm:$0xff] %v386
                %v388 = vld [vmem:[%s350 + $0x120] sm:$0xff]
                %389 = vst [vmem:[%s351 + $0x90] sm:$0xff] %v388
                %v390 = vld [vmem:[%s350 + $0x130] sm:$0xff]
                %391 = vst [vmem:[%s351 + $0x98] sm:$0xff] %v390
              $region77: #{conv_regressor_forward.1} parent=71 // loop_footer
                %s349 = sadd.s32 1, %s345
              $region78: #{conv_regressor_forward.1} parent=71 // loop_footer_branch
                %344 = sbr.rel target = $region74
              $region79: #{conv_regressor_forward.1} parent=71 // loop_exit
                _
            $region72: #{conv_regressor_forward.1} parent=63 // pred_fallthru
              _
          $region64: #{conv_regressor_forward.1} parent=59 // pred_fallthru
            _
          %444 = vnop
        $region60: #{conv_regressor_forward.1} parent=55 // pred_fallthru
          _
      $region56: #{conv_regressor_forward.1} parent=5 // pred_fallthru
        _
      %p445 = scmp.le.s32.totalorder 1, %s17
      %p446 = scmp.lt.s32.totalorder %s17, 3
      %p447 = pnand %p445, %p446
      %p448 = pneg %p447
      // Predicated region
      $region95: #{conv_regressor_forward.1} parent=5 // pred_check
        _
      $region96: #{conv_regressor_forward.1} parent=5 // pred_check_branch
        %450 = sbr.rel (%p447) target = $region98
      $region97: #{conv_regressor_forward.1} parent=5 // pred_region
        %s451 = ssub.s32 %s17, 1
        %s452 = sand.u32 %s30, 1
        %s453 = sand.u32 %s30, 1
        %s454 = smul.addr %s453, 160
        %s455 = scalar_lea.vmem [#allocation2], %s454
        // Predicated region
        $region99: #{conv_regressor_forward.1} parent=97 // pred_check
          %p456 = pneg %p43
        $region100: #{conv_regressor_forward.1} parent=97 // pred_check_branch
          %458 = sbr.rel (%p456) target = $region102
        $region101: #{conv_regressor_forward.1} parent=97 // pred_region
          _
        $region102: #{conv_regressor_forward.1} parent=97 // pred_fallthru
          _
        %s459 = sand.u32 %s30, 1
        %s460 = sand.u32 %s30, 1
        %s461 = smul.addr %s460, 160
        %s462 = scalar_lea.vmem [#allocation2], %s461
        %p463 = pneg %p43
        %p464 = pneg %p40
        %p465 = pneg %p64
        %p466 = pneg %p61
        %p467 = pneg %p85
        %p468 = pneg %p82
        %p469 = pneg %p106
        %p470 = pneg %p103
        %p471 = pneg %p127
        %p472 = pneg %p124
        %p473 = pneg %p148
        %p474 = pneg %p145
        %p475 = pneg %p169
        %p476 = pneg %p166
        %p477 = pneg %p190
        %p478 = pneg %p187
        %p479 = pneg %p211
        %p480 = pneg %p208
        %p481 = pneg %p232
        %p482 = pneg %p229
        %p483 = pneg %p253
        %p484 = pneg %p250
        %p485 = pneg %p279
        %p486 = pneg %p276
        %p487 = scmp.lt.s32.totalorder %s22, 1
        %s488 = scalar_select %p487, %s22, 1
        %s489 = smul.addr %s488, 8
        %s490 = scalar_lea.vmem %s11, %s489
        %p491 = scmp.lt.s32.totalorder %s22, 1
        %s492 = scalar_select %p491, %s22, 1
        %s493 = smul.addr %s492, 8
        %s494 = scalar_lea.vmem %s11, %s493
        %v495 = vld [vmem:[%s455] sm:$0xff]
        %v496 = vld [vmem:[%s455 + $0x8] sm:$0xff]
        %v497 = vld [vmem:[%s455 + $0x10] sm:$0xff]
        %v498 = vld [vmem:[%s455 + $0x18] sm:$0xff]
        %v499 = vld [vmem:[%s455 + $0x20] sm:$0xff]
        %v500 = vld [vmem:[%s455 + $0x28] sm:$0xff]
        %v501 = vld [vmem:[%s455 + $0x30] sm:$0xff]
        %v502 = vld [vmem:[%s455 + $0x38] sm:$0xff]
        %v503 = vld [vmem:[%s455 + $0x40] sm:$0xff]
        %v504 = vld [vmem:[%s455 + $0x48] sm:$0xff]
        %v505 = vld [vmem:[%s455 + $0x50] sm:$0xff]
        %v506 = vld [vmem:[%s455 + $0x58] sm:$0xff]
        %v507 = vld [vmem:[%s455 + $0x60] sm:$0xff]
        %v508 = vld [vmem:[%s455 + $0x68] sm:$0xff]
        %v509 = vld [vmem:[%s455 + $0x70] sm:$0xff]
        %v510 = vld [vmem:[%s455 + $0x78] sm:$0xff]
        %v511 = vld [vmem:[%s455 + $0x80] sm:$0xff]
        %v512 = vld [vmem:[%s455 + $0x88] sm:$0xff]
        %v513 = vld [vmem:[%s455 + $0x90] sm:$0xff]
        %v514 = vld [vmem:[%s455 + $0x98] sm:$0xff]
        %v515 = vld [vmem:[%s1] sm:$0xff]
        %v516 = vld [vmem:[%s1 + $0x8] sm:$0xff]
        %v517 = vld [vmem:[%s1 + $0x10] sm:$0xff]
        %v518 = vld [vmem:[%s1 + $0x18] sm:$0xff]
        %v519 = vld [vmem:[%s1 + $0x20] sm:$0xff]
        %v520 = vld [vmem:[%s1 + $0x28] sm:$0xff]
        %v521 = vld [vmem:[%s1 + $0x30] sm:$0xff]
        %v522 = vld [vmem:[%s1 + $0x38] sm:$0xff]
        %v523 = vld [vmem:[%s1 + $0x40] sm:$0xff]
        %v524 = vld [vmem:[%s1 + $0x48] sm:$0xff]
        %v525 = vld [vmem:[%s1 + $0x50] sm:$0xff]
        %v526 = vld [vmem:[%s1 + $0x58] sm:$0xff]
        %v527 = vld [vmem:[%s1 + $0x60] sm:$0xff]
        %v528 = vld [vmem:[%s1 + $0x68] sm:$0xff]
        %v529 = vld [vmem:[%s1 + $0x70] sm:$0xf]
        %v530 = vld [vmem:[%s1 + $0x78] sm:$0xf]
        %s531 = scalar_lea.vmem %s1, 128
        %v532 = vld [vmem:[%s531] sm:$0xff]
        %v533 = vld [vmem:[%s531 + $0x8] sm:$0xff]
        %v534 = vld [vmem:[%s531 + $0x10] sm:$0xff]
        %v535 = vld [vmem:[%s531 + $0x18] sm:$0xff]
        %v536 = vld [vmem:[%s531 + $0x20] sm:$0xff]
        %v537 = vld [vmem:[%s531 + $0x28] sm:$0xff]
        %v538 = vld [vmem:[%s531 + $0x30] sm:$0xff]
        %v539 = vld [vmem:[%s531 + $0x38] sm:$0xff]
        %v540 = vld [vmem:[%s531 + $0x40] sm:$0xff]
        %v541 = vld [vmem:[%s531 + $0x48] sm:$0xff]
        %v542 = vld [vmem:[%s531 + $0x50] sm:$0xff]
        %v543 = vld [vmem:[%s531 + $0x58] sm:$0xff]
        %v544 = vld [vmem:[%s531 + $0x60] sm:$0xff]
        %v545 = vld [vmem:[%s531 + $0x68] sm:$0xff]
        %v546 = vld [vmem:[%s531 + $0x70] sm:$0xf]
        %v547 = vld [vmem:[%s531 + $0x78] sm:$0xf]
        %vm548 = vcmask 490496
        %v550 = vsel %vm548, %v496, 0
        %v553 = vsel %vm548, %v497, 0
        %v556 = vsel %vm548, %v498, 0
        %v559 = vsel %vm548, %v499, 0
        %v562 = vsel %vm548, %v500, 0
        %v565 = vsel %vm548, %v501, 0
        %v568 = vsel %vm548, %v502, 0
        %v571 = vsel %vm548, %v503, 0
        %v574 = vsel %vm548, %v504, 0
        %v577 = vsel %vm548, %v505, 0
        %v580 = vsel %vm548, %v506, 0
        %v583 = vsel %vm548, %v507, 0
        %v586 = vsel %vm548, %v508, 0
        %v589 = vsel %vm548, %v509, 0
        %v592 = vsel %vm548, %v510, 0
        %v595 = vsel %vm548, %v511, 0
        %v598 = vsel %vm548, %v512, 0
        %v601 = vsel %vm548, %v513, 0
        %vm603 = vcmask 1043456
        %v605 = vsel %vm603, %v546, 0
        %v608 = vsel %vm603, %v547, 0
        %610 = vmatprep.subr.mxu0 %v533
        %611 = vmatpush1.msra.mxu0 %v532
        %612 = vmatprep.subr.mxu0 %v535
        %613 = vmatpush1.msra.mxu0 %v534
        %614 = vmatprep.subr.mxu0 %v537
        %615 = vmatpush1.msra.mxu0 %v536
        %616 = vmatprep.subr.mxu0 %v539
        %617 = vmatpush1.msra.mxu0 %v538
        %618 = vmatprep.subr.mxu0 %v541
        %619 = vmatpush1.msra.mxu0 %v540
        %620 = vmatprep.subr.mxu0 %v543
        %621 = vmatpush1.msra.mxu0 %v542
        %622 = vmatprep.subr.mxu0 %v545
        %623 = vmatpush1.msra.mxu0 %v544
        %624 = vmatprep.subr.mxu0 %v608
        %625 = vmatpush1.msra.mxu0 %v605
        %626 = vmatprep.subr.mxu0 0.0
        %627 = vmatpush1.msra.mxu0 0.0
        %628 = vmatprep.subr.mxu0 0.0
        %629 = vmatpush1.msra.mxu0 0.0
        %630 = vmatprep.subr.mxu0 0.0
        %631 = vmatpush1.msra.mxu0 0.0
        %632 = vmatprep.subr.mxu0 0.0
        %633 = vmatpush1.msra.mxu0 0.0
        %634 = vmatprep.subr.mxu0 0.0
        %635 = vmatpush1.msra.mxu0 0.0
        %636 = vmatprep.subr.mxu0 0.0
        %637 = vmatpush1.msra.mxu0 0.0
        %638 = vmatprep.subr.mxu0 0.0
        %639 = vmatpush1.msra.mxu0 0.0
        %640 = vmatprep.subr.mxu0 0.0
        %641 = vmatpush1.msra.mxu0 0.0
        %642 = vmatprep.subr.mxu0 0.0
        %643 = vmatpush1.msra.mxu0 0.0
        %644 = vmatprep.subr.mxu0 0.0
        %645 = vmatpush1.msra.mxu0 0.0
        %646 = vmatprep.subr.mxu0 0.0
        %647 = vmatpush1.msra.mxu0 0.0
        %648 = vmatprep.subr.mxu0 0.0
        %649 = vmatpush1.msra.mxu0 0.0
        %650 = vmatprep.subr.mxu0 0.0
        %651 = vmatpush1.msra.mxu0 0.0
        %652 = vmatprep.subr.mxu0 0.0
        %653 = vmatpush1.msra.mxu0 0.0
        %654 = vmatprep.subr.mxu0 0.0
        %655 = vmatpush1.msra.mxu0 0.0
        %656 = vmatprep.subr.mxu0 0.0
        %657 = vmatpush1.msra.mxu0 0.0
        %658 = vmatprep.subr.mxu0 0.0
        %659 = vmatpush1.msra.mxu0 0.0
        %660 = vmatprep.subr.mxu0 0.0
        %661 = vmatpush1.msra.mxu0 0.0
        %662 = vmatprep.subr.mxu0 0.0
        %663 = vmatpush1.msra.mxu0 0.0
        %664 = vmatprep.subr.mxu0 0.0
        %665 = vmatpush1.msra.mxu0 0.0
        %666 = vmatprep.subr.mxu0 0.0
        %667 = vmatpush1.msra.mxu0 0.0
        %668 = vmatprep.subr.mxu0 0.0
        %669 = vmatpush1.msra.mxu0 0.0
        %670 = vmatprep.subr.mxu0 0.0
        %671 = vmatpush1.msra.mxu0 0.0
        %672 = vmatprep.subr.mxu0 0.0
        %673 = vmatpush1.msra.mxu0 0.0
        %674 = vmatprep.mubr.f32.mxu0 0.0
        %675 = vmatmul.mubr.f32.gmra.mrb[0].mxu0 %v550
        %v676 = vpop.f32.mrb[0].mxu0
        %v677 = vadd.f32 0.0, %v676
        %v678 = vpop.f32.mrb[0].mxu0
        %v679 = vadd.f32 0.0, %v678
        %680 = vmatprep.mubr.f32.mxu0 0.0
        %681 = vmatmul.mubr.f32.gmra.mrb[0].mxu0 %v553
        %v682 = vpop.f32.mrb[0].mxu0
        %v683 = vadd.f32 0.0, %v682
        %v684 = vpop.f32.mrb[0].mxu0
        %v685 = vadd.f32 0.0, %v684
        %686 = vmatprep.mubr.f32.mxu0 0.0
        %687 = vmatmul.mubr.f32.gmra.mrb[0].mxu0 %v556
        %v688 = vpop.f32.mrb[0].mxu0
        %v689 = vadd.f32 0.0, %v688
        %v690 = vpop.f32.mrb[0].mxu0
        %v691 = vadd.f32 0.0, %v690
        %692 = vmatprep.mubr.f32.mxu0 0.0
        %693 = vmatmul.mubr.f32.gmra.mrb[0].mxu0 %v559
        %v694 = vpop.f32.mrb[0].mxu0
        %v695 = vadd.f32 0.0, %v694
        %v696 = vpop.f32.mrb[0].mxu0
        %v697 = vadd.f32 0.0, %v696
        %698 = vmatprep.mubr.f32.mxu0 0.0
        %699 = vmatmul.mubr.f32.gmra.mrb[0].mxu0 %v562
        %v700 = vpop.f32.mrb[0].mxu0
        %v701 = vadd.f32 0.0, %v700
        %v702 = vpop.f32.mrb[0].mxu0
        %v703 = vadd.f32 0.0, %v702
        %704 = vmatprep.mubr.f32.mxu0 0.0
        %705 = vmatmul.mubr.f32.gmra.mrb[0].mxu0 %v565
        %v706 = vpop.f32.mrb[0].mxu0
        %v707 = vadd.f32 0.0, %v706
        %v708 = vpop.f32.mrb[0].mxu0
        %v709 = vadd.f32 0.0, %v708
        %710 = vmatprep.mubr.f32.mxu0 0.0
        %711 = vmatmul.mubr.f32.gmra.mrb[0].mxu0 %v568
        %v712 = vpop.f32.mrb[0].mxu0
        %v713 = vadd.f32 0.0, %v712
        %v714 = vpop.f32.mrb[0].mxu0
        %v715 = vadd.f32 0.0, %v714
        %716 = vmatprep.mubr.f32.mxu0 0.0
        %717 = vmatmul.mubr.f32.gmra.mrb[0].mxu0 %v571
        %v718 = vpop.f32.mrb[0].mxu0
        %v719 = vadd.f32 0.0, %v718
        %v720 = vpop.f32.mrb[0].mxu0
        %v721 = vadd.f32 0.0, %v720
        %722 = vmatprep.mubr.f32.mxu0 0.0
        %723 = vmatmul.mubr.f32.gmra.mrb[0].mxu0 %v574
        %v724 = vpop.f32.mrb[0].mxu0
        %v725 = vadd.f32 0.0, %v724
        %v726 = vpop.f32.mrb[0].mxu0
        %v727 = vadd.f32 0.0, %v726
        %728 = vmatprep.mubr.f32.mxu0 0.0
        %729 = vmatmul.mubr.f32.gmra.mrb[0].mxu0 %v577
        %v730 = vpop.f32.mrb[0].mxu0
        %v731 = vadd.f32 0.0, %v730
        %v732 = vpop.f32.mrb[0].mxu0
        %v733 = vadd.f32 0.0, %v732
        %734 = vmatprep.mubr.f32.mxu0 0.0
        %735 = vmatmul.mubr.f32.gmra.mrb[0].mxu0 %v580
        %v736 = vpop.f32.mrb[0].mxu0
        %v737 = vadd.f32 0.0, %v736
        %v738 = vpop.f32.mrb[0].mxu0
        %v739 = vadd.f32 0.0, %v738
        %740 = vmatprep.mubr.f32.mxu0 0.0
        %741 = vmatmul.mubr.f32.gmra.mrb[0].mxu0 %v583
        %v742 = vpop.f32.mrb[0].mxu0
        %v743 = vadd.f32 0.0, %v742
        %v744 = vpop.f32.mrb[0].mxu0
        %v745 = vadd.f32 0.0, %v744
        %746 = vmatprep.mubr.f32.mxu0 0.0
        %747 = vmatmul.mubr.f32.gmra.mrb[0].mxu0 %v586
        %v748 = vpop.f32.mrb[0].mxu0
        %v749 = vadd.f32 0.0, %v748
        %v750 = vpop.f32.mrb[0].mxu0
        %v751 = vadd.f32 0.0, %v750
        %752 = vmatprep.mubr.f32.mxu0 0.0
        %753 = vmatmul.mubr.f32.gmra.mrb[0].mxu0 %v589
        %v754 = vpop.f32.mrb[0].mxu0
        %v755 = vadd.f32 0.0, %v754
        %v756 = vpop.f32.mrb[0].mxu0
        %v757 = vadd.f32 0.0, %v756
        %758 = vmatprep.mubr.f32.mxu0 0.0
        %759 = vmatmul.mubr.f32.gmra.mrb[0].mxu0 %v592
        %v760 = vpop.f32.mrb[0].mxu0
        %v761 = vadd.f32 0.0, %v760
        %v762 = vpop.f32.mrb[0].mxu0
        %v763 = vadd.f32 0.0, %v762
        %764 = vmatprep.mubr.f32.mxu0 0.0
        %765 = vmatmul.mubr.f32.gmra.mrb[0].mxu0 %v595
        %v766 = vpop.f32.mrb[0].mxu0
        %v767 = vadd.f32 0.0, %v766
        %v768 = vpop.f32.mrb[0].mxu0
        %v769 = vadd.f32 0.0, %v768
        %770 = vmatprep.mubr.f32.mxu0 0.0
        %771 = vmatmul.mubr.f32.gmra.mrb[0].mxu0 %v598
        %v772 = vpop.f32.mrb[0].mxu0
        %v773 = vadd.f32 0.0, %v772
        %v774 = vpop.f32.mrb[0].mxu0
        %v775 = vadd.f32 0.0, %v774
        %776 = vmatprep.mubr.f32.mxu0 0.0
        %777 = vmatmul.mubr.f32.gmra.mrb[0].mxu0 %v601
        %v778 = vpop.f32.mrb[0].mxu0
        %v779 = vadd.f32 0.0, %v778
        %v780 = vpop.f32.mrb[0].mxu0
        %v781 = vadd.f32 0.0, %v780
        %782 = vdwg.mxu0
        %v784 = vsel %vm548, %v495, 0
        %v787 = vsel %vm603, %v529, 0
        %v790 = vsel %vm603, %v530, 0
        %792 = vmatprep.subr.mxu0 %v516
        %793 = vmatpush1.msra.mxu0 %v515
        %794 = vmatprep.subr.mxu0 %v518
        %795 = vmatpush1.msra.mxu0 %v517
        %796 = vmatprep.subr.mxu0 %v520
        %797 = vmatpush1.msra.mxu0 %v519
        %798 = vmatprep.subr.mxu0 %v522
        %799 = vmatpush1.msra.mxu0 %v521
        %800 = vmatprep.subr.mxu0 %v524
        %801 = vmatpush1.msra.mxu0 %v523
        %802 = vmatprep.subr.mxu0 %v526
        %803 = vmatpush1.msra.mxu0 %v525
        %804 = vmatprep.subr.mxu0 %v528
        %805 = vmatpush1.msra.mxu0 %v527
        %806 = vmatprep.subr.mxu0 %v790
        %807 = vmatpush1.msra.mxu0 %v787
        %808 = vmatprep.subr.mxu0 0.0
        %809 = vmatpush1.msra.mxu0 0.0
        %810 = vmatprep.subr.mxu0 0.0
        %811 = vmatpush1.msra.mxu0 0.0
        %812 = vmatprep.subr.mxu0 0.0
        %813 = vmatpush1.msra.mxu0 0.0
        %814 = vmatprep.subr.mxu0 0.0
        %815 = vmatpush1.msra.mxu0 0.0
        %816 = vmatprep.subr.mxu0 0.0
        %817 = vmatpush1.msra.mxu0 0.0
        %818 = vmatprep.subr.mxu0 0.0
        %819 = vmatpush1.msra.mxu0 0.0
        %820 = vmatprep.subr.mxu0 0.0
        %821 = vmatpush1.msra.mxu0 0.0
        %822 = vmatprep.subr.mxu0 0.0
        %823 = vmatpush1.msra.mxu0 0.0
        %824 = vmatprep.subr.mxu0 0.0
        %825 = vmatpush1.msra.mxu0 0.0
        %826 = vmatprep.subr.mxu0 0.0
        %827 = vmatpush1.msra.mxu0 0.0
        %828 = vmatprep.subr.mxu0 0.0
        %829 = vmatpush1.msra.mxu0 0.0
        %830 = vmatprep.subr.mxu0 0.0
        %831 = vmatpush1.msra.mxu0 0.0
        %832 = vmatprep.subr.mxu0 0.0
        %833 = vmatpush1.msra.mxu0 0.0
        %834 = vmatprep.subr.mxu0 0.0
        %835 = vmatpush1.msra.mxu0 0.0
        %836 = vmatprep.subr.mxu0 0.0
        %837 = vmatpush1.msra.mxu0 0.0
        %838 = vmatprep.subr.mxu0 0.0
        %839 = vmatpush1.msra.mxu0 0.0
        %840 = vmatprep.subr.mxu0 0.0
        %841 = vmatpush1.msra.mxu0 0.0
        %842 = vmatprep.subr.mxu0 0.0
        %843 = vmatpush1.msra.mxu0 0.0
        %844 = vmatprep.subr.mxu0 0.0
        %845 = vmatpush1.msra.mxu0 0.0
        %846 = vmatprep.subr.mxu0 0.0
        %847 = vmatpush1.msra.mxu0 0.0
        %848 = vmatprep.subr.mxu0 0.0
        %849 = vmatpush1.msra.mxu0 0.0
        %850 = vmatprep.subr.mxu0 0.0
        %851 = vmatpush1.msra.mxu0 0.0
        %852 = vmatprep.subr.mxu0 0.0
        %853 = vmatpush1.msra.mxu0 0.0
        %854 = vmatprep.subr.mxu0 0.0
        %855 = vmatpush1.msra.mxu0 0.0
        %856 = vmatprep.mubr.f32.mxu0 0.0
        %857 = vmatmul.mubr.f32.gmra.mrb[0].mxu0 %v784
        %v858 = vpop.f32.mrb[0].mxu0
        %v859 = vadd.f32 %v677, %v858
        %v860 = vpop.f32.mrb[0].mxu0
        %v861 = vadd.f32 %v679, %v860
        %862 = vmatprep.mubr.f32.mxu0 0.0
        %863 = vmatmul.mubr.f32.gmra.mrb[0].mxu0 %v550
        %v864 = vpop.f32.mrb[0].mxu0
        %v865 = vadd.f32 %v683, %v864
        %v866 = vpop.f32.mrb[0].mxu0
        %v867 = vadd.f32 %v685, %v866
        %868 = vmatprep.mubr.f32.mxu0 0.0
        %869 = vmatmul.mubr.f32.gmra.mrb[0].mxu0 %v553
        %v870 = vpop.f32.mrb[0].mxu0
        %v871 = vadd.f32 %v689, %v870
        %v872 = vpop.f32.mrb[0].mxu0
        %v873 = vadd.f32 %v691, %v872
        %874 = vmatprep.mubr.f32.mxu0 0.0
        %875 = vmatmul.mubr.f32.gmra.mrb[0].mxu0 %v556
        %v876 = vpop.f32.mrb[0].mxu0
        %v877 = vadd.f32 %v695, %v876
        %v878 = vpop.f32.mrb[0].mxu0
        %v879 = vadd.f32 %v697, %v878
        %880 = vmatprep.mubr.f32.mxu0 0.0
        %881 = vmatmul.mubr.f32.gmra.mrb[0].mxu0 %v559
        %v882 = vpop.f32.mrb[0].mxu0
        %v883 = vadd.f32 %v701, %v882
        %v884 = vpop.f32.mrb[0].mxu0
        %v885 = vadd.f32 %v703, %v884
        %886 = vmatprep.mubr.f32.mxu0 0.0
        %887 = vmatmul.mubr.f32.gmra.mrb[0].mxu0 %v562
        %v888 = vpop.f32.mrb[0].mxu0
        %v889 = vadd.f32 %v707, %v888
        %v890 = vpop.f32.mrb[0].mxu0
        %v891 = vadd.f32 %v709, %v890
        %892 = vmatprep.mubr.f32.mxu0 0.0
        %893 = vmatmul.mubr.f32.gmra.mrb[0].mxu0 %v565
        %v894 = vpop.f32.mrb[0].mxu0
        %v895 = vadd.f32 %v713, %v894
        %v896 = vpop.f32.mrb[0].mxu0
        %v897 = vadd.f32 %v715, %v896
        %898 = vmatprep.mubr.f32.mxu0 0.0
        %899 = vmatmul.mubr.f32.gmra.mrb[0].mxu0 %v568
        %v900 = vpop.f32.mrb[0].mxu0
        %v901 = vadd.f32 %v719, %v900
        %v902 = vpop.f32.mrb[0].mxu0
        %v903 = vadd.f32 %v721, %v902
        %904 = vmatprep.mubr.f32.mxu0 0.0
        %905 = vmatmul.mubr.f32.gmra.mrb[0].mxu0 %v571
        %v906 = vpop.f32.mrb[0].mxu0
        %v907 = vadd.f32 %v725, %v906
        %v908 = vpop.f32.mrb[0].mxu0
        %v909 = vadd.f32 %v727, %v908
        %910 = vmatprep.mubr.f32.mxu0 0.0
        %911 = vmatmul.mubr.f32.gmra.mrb[0].mxu0 %v574
        %v912 = vpop.f32.mrb[0].mxu0
        %v913 = vadd.f32 %v731, %v912
        %v914 = vpop.f32.mrb[0].mxu0
        %v915 = vadd.f32 %v733, %v914
        %916 = vmatprep.mubr.f32.mxu0 0.0
        %917 = vmatmul.mubr.f32.gmra.mrb[0].mxu0 %v577
        %v918 = vpop.f32.mrb[0].mxu0
        %v919 = vadd.f32 %v737, %v918
        %v920 = vpop.f32.mrb[0].mxu0
        %v921 = vadd.f32 %v739, %v920
        %922 = vmatprep.mubr.f32.mxu0 0.0
        %923 = vmatmul.mubr.f32.gmra.mrb[0].mxu0 %v580
        %v924 = vpop.f32.mrb[0].mxu0
        %v925 = vadd.f32 %v743, %v924
        %v926 = vpop.f32.mrb[0].mxu0
        %v927 = vadd.f32 %v745, %v926
        %928 = vmatprep.mubr.f32.mxu0 0.0
        %929 = vmatmul.mubr.f32.gmra.mrb[0].mxu0 %v583
        %v930 = vpop.f32.mrb[0].mxu0
        %v931 = vadd.f32 %v749, %v930
        %v932 = vpop.f32.mrb[0].mxu0
        %v933 = vadd.f32 %v751, %v932
        %934 = vmatprep.mubr.f32.mxu0 0.0
        %935 = vmatmul.mubr.f32.gmra.mrb[0].mxu0 %v586
        %v936 = vpop.f32.mrb[0].mxu0
        %v937 = vadd.f32 %v755, %v936
        %v938 = vpop.f32.mrb[0].mxu0
        %v939 = vadd.f32 %v757, %v938
        %940 = vmatprep.mubr.f32.mxu0 0.0
        %941 = vmatmul.mubr.f32.gmra.mrb[0].mxu0 %v589
        %v942 = vpop.f32.mrb[0].mxu0
        %v943 = vadd.f32 %v761, %v942
        %v944 = vpop.f32.mrb[0].mxu0
        %v945 = vadd.f32 %v763, %v944
        %946 = vmatprep.mubr.f32.mxu0 0.0
        %947 = vmatmul.mubr.f32.gmra.mrb[0].mxu0 %v592
        %v948 = vpop.f32.mrb[0].mxu0
        %v949 = vadd.f32 %v767, %v948
        %v950 = vpop.f32.mrb[0].mxu0
        %v951 = vadd.f32 %v769, %v950
        %952 = vmatprep.mubr.f32.mxu0 0.0
        %953 = vmatmul.mubr.f32.gmra.mrb[0].mxu0 %v595
        %v954 = vpop.f32.mrb[0].mxu0
        %v955 = vadd.f32 %v773, %v954
        %v956 = vpop.f32.mrb[0].mxu0
        %v957 = vadd.f32 %v775, %v956
        %958 = vmatprep.mubr.f32.mxu0 0.0
        %959 = vmatmul.mubr.f32.gmra.mrb[0].mxu0 %v598
        %v960 = vpop.f32.mrb[0].mxu0
        %v961 = vadd.f32 %v779, %v960
        %v962 = vpop.f32.mrb[0].mxu0
        %v963 = vadd.f32 %v781, %v962
        %964 = vdwg.mxu0
        %s965 = scalar_lea.vmem %s1, 256
        %v966 = vld [vmem:[%s965] sm:$0xff]
        %v967 = vld [vmem:[%s965 + $0x8] sm:$0xff]
        %v968 = vld [vmem:[%s965 + $0x10] sm:$0xff]
        %v969 = vld [vmem:[%s965 + $0x18] sm:$0xff]
        %v970 = vld [vmem:[%s965 + $0x20] sm:$0xff]
        %v971 = vld [vmem:[%s965 + $0x28] sm:$0xff]
        %v972 = vld [vmem:[%s965 + $0x30] sm:$0xff]
        %v973 = vld [vmem:[%s965 + $0x38] sm:$0xff]
        %v974 = vld [vmem:[%s965 + $0x40] sm:$0xff]
        %v975 = vld [vmem:[%s965 + $0x48] sm:$0xff]
        %v976 = vld [vmem:[%s965 + $0x50] sm:$0xff]
        %v977 = vld [vmem:[%s965 + $0x58] sm:$0xff]
        %v978 = vld [vmem:[%s965 + $0x60] sm:$0xff]
        %v979 = vld [vmem:[%s965 + $0x68] sm:$0xff]
        %v980 = vld [vmem:[%s965 + $0x70] sm:$0xf]
        %v981 = vld [vmem:[%s965 + $0x78] sm:$0xf]
        %v983 = vsel %vm548, %v514, 0
        %v986 = vsel %vm603, %v980, 0
        %v989 = vsel %vm603, %v981, 0
        %991 = vmatprep.subr.mxu0 %v967
        %992 = vmatpush1.msra.mxu0 %v966
        %993 = vmatprep.subr.mxu0 %v969
        %994 = vmatpush1.msra.mxu0 %v968
        %995 = vmatprep.subr.mxu0 %v971
        %996 = vmatpush1.msra.mxu0 %v970
        %997 = vmatprep.subr.mxu0 %v973
        %998 = vmatpush1.msra.mxu0 %v972
        %999 = vmatprep.subr.mxu0 %v975
        %1000 = vmatpush1.msra.mxu0 %v974
        %1001 = vmatprep.subr.mxu0 %v977
        %1002 = vmatpush1.msra.mxu0 %v976
        %1003 = vmatprep.subr.mxu0 %v979
        %1004 = vmatpush1.msra.mxu0 %v978
        %1005 = vmatprep.subr.mxu0 %v989
        %1006 = vmatpush1.msra.mxu0 %v986
        %1007 = vmatprep.subr.mxu0 0.0
        %1008 = vmatpush1.msra.mxu0 0.0
        %1009 = vmatprep.subr.mxu0 0.0
        %1010 = vmatpush1.msra.mxu0 0.0
        %1011 = vmatprep.subr.mxu0 0.0
        %1012 = vmatpush1.msra.mxu0 0.0
        %1013 = vmatprep.subr.mxu0 0.0
        %1014 = vmatpush1.msra.mxu0 0.0
        %1015 = vmatprep.subr.mxu0 0.0
        %1016 = vmatpush1.msra.mxu0 0.0
        %1017 = vmatprep.subr.mxu0 0.0
        %1018 = vmatpush1.msra.mxu0 0.0
        %1019 = vmatprep.subr.mxu0 0.0
        %1020 = vmatpush1.msra.mxu0 0.0
        %1021 = vmatprep.subr.mxu0 0.0
        %1022 = vmatpush1.msra.mxu0 0.0
        %1023 = vmatprep.subr.mxu0 0.0
        %1024 = vmatpush1.msra.mxu0 0.0
        %1025 = vmatprep.subr.mxu0 0.0
        %1026 = vmatpush1.msra.mxu0 0.0
        %1027 = vmatprep.subr.mxu0 0.0
        %1028 = vmatpush1.msra.mxu0 0.0
        %1029 = vmatprep.subr.mxu0 0.0
        %1030 = vmatpush1.msra.mxu0 0.0
        %1031 = vmatprep.subr.mxu0 0.0
        %1032 = vmatpush1.msra.mxu0 0.0
        %1033 = vmatprep.subr.mxu0 0.0
        %1034 = vmatpush1.msra.mxu0 0.0
        %1035 = vmatprep.subr.mxu0 0.0
        %1036 = vmatpush1.msra.mxu0 0.0
        %1037 = vmatprep.subr.mxu0 0.0
        %1038 = vmatpush1.msra.mxu0 0.0
        %1039 = vmatprep.subr.mxu0 0.0
        %1040 = vmatpush1.msra.mxu0 0.0
        %1041 = vmatprep.subr.mxu0 0.0
        %1042 = vmatpush1.msra.mxu0 0.0
        %1043 = vmatprep.subr.mxu0 0.0
        %1044 = vmatpush1.msra.mxu0 0.0
        %1045 = vmatprep.subr.mxu0 0.0
        %1046 = vmatpush1.msra.mxu0 0.0
        %1047 = vmatprep.subr.mxu0 0.0
        %1048 = vmatpush1.msra.mxu0 0.0
        %1049 = vmatprep.subr.mxu0 0.0
        %1050 = vmatpush1.msra.mxu0 0.0
        %1051 = vmatprep.subr.mxu0 0.0
        %1052 = vmatpush1.msra.mxu0 0.0
        %1053 = vmatprep.subr.mxu0 0.0
        %1054 = vmatpush1.msra.mxu0 0.0
        %1055 = vmatprep.mubr.f32.mxu0 0.0
        %1056 = vmatmul.mubr.f32.gmra.mrb[0].mxu0 %v553
        %v1057 = vpop.f32.mrb[0].mxu0
        %v1058 = vadd.f32 0.0, %v1057
        %v1059 = vpop.f32.mrb[0].mxu0
        %v1060 = vadd.f32 0.0, %v1059
        %1061 = vmatprep.mubr.f32.mxu0 0.0
        %1062 = vmatmul.mubr.f32.gmra.mrb[0].mxu0 %v556
        %v1063 = vpop.f32.mrb[0].mxu0
        %v1064 = vadd.f32 0.0, %v1063
        %v1065 = vpop.f32.mrb[0].mxu0
        %v1066 = vadd.f32 0.0, %v1065
        %1067 = vmatprep.mubr.f32.mxu0 0.0
        %1068 = vmatmul.mubr.f32.gmra.mrb[0].mxu0 %v559
        %v1069 = vpop.f32.mrb[0].mxu0
        %v1070 = vadd.f32 0.0, %v1069
        %v1071 = vpop.f32.mrb[0].mxu0
        %v1072 = vadd.f32 0.0, %v1071
        %1073 = vmatprep.mubr.f32.mxu0 0.0
        %1074 = vmatmul.mubr.f32.gmra.mrb[0].mxu0 %v562
        %v1075 = vpop.f32.mrb[0].mxu0
        %v1076 = vadd.f32 0.0, %v1075
        %v1077 = vpop.f32.mrb[0].mxu0
        %v1078 = vadd.f32 0.0, %v1077
        %1079 = vmatprep.mubr.f32.mxu0 0.0
        %1080 = vmatmul.mubr.f32.gmra.mrb[0].mxu0 %v565
        %v1081 = vpop.f32.mrb[0].mxu0
        %v1082 = vadd.f32 0.0, %v1081
        %v1083 = vpop.f32.mrb[0].mxu0
        %v1084 = vadd.f32 0.0, %v1083
        %1085 = vmatprep.mubr.f32.mxu0 0.0
        %1086 = vmatmul.mubr.f32.gmra.mrb[0].mxu0 %v568
        %v1087 = vpop.f32.mrb[0].mxu0
        %v1088 = vadd.f32 0.0, %v1087
        %v1089 = vpop.f32.mrb[0].mxu0
        %v1090 = vadd.f32 0.0, %v1089
        %1091 = vmatprep.mubr.f32.mxu0 0.0
        %1092 = vmatmul.mubr.f32.gmra.mrb[0].mxu0 %v571
        %v1093 = vpop.f32.mrb[0].mxu0
        %v1094 = vadd.f32 0.0, %v1093
        %v1095 = vpop.f32.mrb[0].mxu0
        %v1096 = vadd.f32 0.0, %v1095
        %1097 = vmatprep.mubr.f32.mxu0 0.0
        %1098 = vmatmul.mubr.f32.gmra.mrb[0].mxu0 %v574
        %v1099 = vpop.f32.mrb[0].mxu0
        %v1100 = vadd.f32 0.0, %v1099
        %v1101 = vpop.f32.mrb[0].mxu0
        %v1102 = vadd.f32 0.0, %v1101
        %1103 = vmatprep.mubr.f32.mxu0 0.0
        %1104 = vmatmul.mubr.f32.gmra.mrb[0].mxu0 %v577
        %v1105 = vpop.f32.mrb[0].mxu0
        %v1106 = vadd.f32 0.0, %v1105
        %v1107 = vpop.f32.mrb[0].mxu0
        %v1108 = vadd.f32 0.0, %v1107
        %1109 = vmatprep.mubr.f32.mxu0 0.0
        %1110 = vmatmul.mubr.f32.gmra.mrb[0].mxu0 %v580
        %v1111 = vpop.f32.mrb[0].mxu0
        %v1112 = vadd.f32 0.0, %v1111
        %v1113 = vpop.f32.mrb[0].mxu0
        %v1114 = vadd.f32 0.0, %v1113
        %1115 = vmatprep.mubr.f32.mxu0 0.0
        %1116 = vmatmul.mubr.f32.gmra.mrb[0].mxu0 %v583
        %v1117 = vpop.f32.mrb[0].mxu0
        %v1118 = vadd.f32 0.0, %v1117
        %v1119 = vpop.f32.mrb[0].mxu0
        %v1120 = vadd.f32 0.0, %v1119
        %1121 = vmatprep.mubr.f32.mxu0 0.0
        %1122 = vmatmul.mubr.f32.gmra.mrb[0].mxu0 %v586
        %v1123 = vpop.f32.mrb[0].mxu0
        %v1124 = vadd.f32 0.0, %v1123
        %v1125 = vpop.f32.mrb[0].mxu0
        %v1126 = vadd.f32 0.0, %v1125
        %1127 = vmatprep.mubr.f32.mxu0 0.0
        %1128 = vmatmul.mubr.f32.gmra.mrb[0].mxu0 %v589
        %v1129 = vpop.f32.mrb[0].mxu0
        %v1130 = vadd.f32 0.0, %v1129
        %v1131 = vpop.f32.mrb[0].mxu0
        %v1132 = vadd.f32 0.0, %v1131
        %1133 = vmatprep.mubr.f32.mxu0 0.0
        %1134 = vmatmul.mubr.f32.gmra.mrb[0].mxu0 %v592
        %v1135 = vpop.f32.mrb[0].mxu0
        %v1136 = vadd.f32 0.0, %v1135
        %v1137 = vpop.f32.mrb[0].mxu0
        %v1138 = vadd.f32 0.0, %v1137
        %1139 = vmatprep.mubr.f32.mxu0 0.0
        %1140 = vmatmul.mubr.f32.gmra.mrb[0].mxu0 %v595
        %v1141 = vpop.f32.mrb[0].mxu0
        %v1142 = vadd.f32 0.0, %v1141
        %v1143 = vpop.f32.mrb[0].mxu0
        %v1144 = vadd.f32 0.0, %v1143
        %1145 = vmatprep.mubr.f32.mxu0 0.0
        %1146 = vmatmul.mubr.f32.gmra.mrb[0].mxu0 %v598
        %v1147 = vpop.f32.mrb[0].mxu0
        %v1148 = vadd.f32 0.0, %v1147
        %v1149 = vpop.f32.mrb[0].mxu0
        %v1150 = vadd.f32 0.0, %v1149
        %1151 = vmatprep.mubr.f32.mxu0 0.0
        %1152 = vmatmul.mubr.f32.gmra.mrb[0].mxu0 %v601
        %v1153 = vpop.f32.mrb[0].mxu0
        %v1154 = vadd.f32 0.0, %v1153
        %v1155 = vpop.f32.mrb[0].mxu0
        %v1156 = vadd.f32 0.0, %v1155
        %1157 = vmatprep.mubr.f32.mxu0 0.0
        %1158 = vmatmul.mubr.f32.gmra.mrb[0].mxu0 %v983
        %v1159 = vpop.f32.mrb[0].mxu0
        %v1160 = vadd.f32 0.0, %v1159
        %v1161 = vpop.f32.mrb[0].mxu0
        %v1162 = vadd.f32 0.0, %v1161
        %1163 = vdwg.mxu0
        %v1164 = vadd.f32 %v859, %v1058
        %v1165 = vadd.f32 %v861, %v1060
        %v1166 = vadd.f32 %v865, %v1064
        %v1167 = vadd.f32 %v867, %v1066
        %v1168 = vadd.f32 %v871, %v1070
        %v1169 = vadd.f32 %v873, %v1072
        %v1170 = vadd.f32 %v877, %v1076
        %v1171 = vadd.f32 %v879, %v1078
        %v1172 = vadd.f32 %v883, %v1082
        %v1173 = vadd.f32 %v885, %v1084
        %v1174 = vadd.f32 %v889, %v1088
        %v1175 = vadd.f32 %v891, %v1090
        %v1176 = vadd.f32 %v895, %v1094
        %v1177 = vadd.f32 %v897, %v1096
        %v1178 = vadd.f32 %v901, %v1100
        %v1179 = vadd.f32 %v903, %v1102
        %v1180 = vadd.f32 %v907, %v1106
        %v1181 = vadd.f32 %v909, %v1108
        %v1182 = vadd.f32 %v913, %v1112
        %v1183 = vadd.f32 %v915, %v1114
        %v1184 = vadd.f32 %v919, %v1118
        %v1185 = vadd.f32 %v921, %v1120
        %v1186 = vadd.f32 %v925, %v1124
        %v1187 = vadd.f32 %v927, %v1126
        %v1188 = vadd.f32 %v931, %v1130
        %v1189 = vadd.f32 %v933, %v1132
        %v1190 = vadd.f32 %v937, %v1136
        %v1191 = vadd.f32 %v939, %v1138
        %v1192 = vadd.f32 %v943, %v1142
        %v1193 = vadd.f32 %v945, %v1144
        %v1194 = vadd.f32 %v949, %v1148
        %v1195 = vadd.f32 %v951, %v1150
        %v1196 = vadd.f32 %v955, %v1154
        %v1197 = vadd.f32 %v957, %v1156
        %v1198 = vadd.f32 %v961, %v1160
        %v1199 = vadd.f32 %v963, %v1162
        %v1200 = vld [vmem:[%s2] sm:$0x3]
        %v1202 = vlaneseq
        %v1203 = vshrl.u32 %v1202, 7
        %v1204 = vsub.s32 0, %v1203
        %v1205 = vrot.slane %v1200, %v1204
        %v1206 = vlaneseq
        %v1207 = vshrl.u32 %v1206, 7
        %v1208 = vsub.s32 1, %v1207
        %v1209 = vrot.slane %v1200, %v1208
        %v1212 = vadd.f32 %v1164, %v1205
        %v1213 = vadd.f32 %v1165, %v1209
        %v1214 = vadd.f32 %v1166, %v1205
        %v1215 = vadd.f32 %v1167, %v1209
        %v1216 = vadd.f32 %v1168, %v1205
        %v1217 = vadd.f32 %v1169, %v1209
        %v1218 = vadd.f32 %v1170, %v1205
        %v1219 = vadd.f32 %v1171, %v1209
        %v1220 = vadd.f32 %v1172, %v1205
        %v1221 = vadd.f32 %v1173, %v1209
        %v1222 = vadd.f32 %v1174, %v1205
        %v1223 = vadd.f32 %v1175, %v1209
        %v1224 = vadd.f32 %v1176, %v1205
        %v1225 = vadd.f32 %v1177, %v1209
        %v1226 = vadd.f32 %v1178, %v1205
        %v1227 = vadd.f32 %v1179, %v1209
        %v1228 = vadd.f32 %v1180, %v1205
        %v1229 = vadd.f32 %v1181, %v1209
        %v1230 = vadd.f32 %v1182, %v1205
        %v1231 = vadd.f32 %v1183, %v1209
        %v1232 = vadd.f32 %v1184, %v1205
        %v1233 = vadd.f32 %v1185, %v1209
        %v1234 = vadd.f32 %v1186, %v1205
        %v1235 = vadd.f32 %v1187, %v1209
        %v1236 = vadd.f32 %v1188, %v1205
        %v1237 = vadd.f32 %v1189, %v1209
        %v1238 = vadd.f32 %v1190, %v1205
        %v1239 = vadd.f32 %v1191, %v1209
        %v1240 = vadd.f32 %v1192, %v1205
        %v1241 = vadd.f32 %v1193, %v1209
        %v1242 = vadd.f32 %v1194, %v1205
        %v1243 = vadd.f32 %v1195, %v1209
        %v1244 = vadd.f32 %v1196, %v1205
        %v1245 = vadd.f32 %v1197, %v1209
        %v1246 = vadd.f32 %v1198, %v1205
        %v1247 = vadd.f32 %v1199, %v1209
        %v1248 = vmax.f32 %v1212, %v1214
        %v1249 = vmax.f32 %v1213, %v1215
        %v1250 = vmax.f32 %v1216, %v1218
        %v1251 = vmax.f32 %v1217, %v1219
        %v1252 = vmax.f32 %v1220, %v1222
        %v1253 = vmax.f32 %v1221, %v1223
        %v1254 = vmax.f32 %v1224, %v1226
        %v1255 = vmax.f32 %v1225, %v1227
        %v1256 = vmax.f32 %v1228, %v1230
        %v1257 = vmax.f32 %v1229, %v1231
        %v1258 = vmax.f32 %v1232, %v1234
        %v1259 = vmax.f32 %v1233, %v1235
        %v1260 = vmax.f32 %v1236, %v1238
        %v1261 = vmax.f32 %v1237, %v1239
        %v1262 = vmax.f32 %v1240, %v1242
        %v1263 = vmax.f32 %v1241, %v1243
        %v1264 = vmax.f32 %v1244, %v1246
        %v1265 = vmax.f32 %v1245, %v1247
        %v1266 = vld [vmem:[%s3] sm:$0xff]
        %v1267 = vld [vmem:[%s3 + $0x8] sm:$0xff]
        %v1268 = vld [vmem:[%s3 + $0x10] sm:$0xff]
        %v1269 = vld [vmem:[%s3 + $0x18] sm:$0xff]
        %v1270 = vld [vmem:[%s3 + $0x20] sm:$0xff]
        %v1271 = vld [vmem:[%s3 + $0x28] sm:$0xff]
        %v1272 = vld [vmem:[%s3 + $0x30] sm:$0xff]
        %v1273 = vld [vmem:[%s3 + $0x38] sm:$0xff]
        %v1274 = vld [vmem:[%s3 + $0x40] sm:$0xff]
        %v1275 = vld [vmem:[%s3 + $0x48] sm:$0xff]
        %v1276 = vld [vmem:[%s3 + $0x50] sm:$0xff]
        %v1277 = vld [vmem:[%s3 + $0x58] sm:$0xff]
        %v1278 = vld [vmem:[%s3 + $0x60] sm:$0xff]
        %v1279 = vld [vmem:[%s3 + $0x68] sm:$0xff]
        %v1280 = vld [vmem:[%s3 + $0x70] sm:$0xff]
        %v1281 = vld [vmem:[%s3 + $0x78] sm:$0xff]
        %v1282 = vld [vmem:[%s3 + $0x80] sm:$0xff]
        %v1283 = vld [vmem:[%s3 + $0x88] sm:$0xff]
        %vm1284 = vcmask 130048
        %v1286 = vsel %vm1284, %v1249, 0
        %v1289 = vsel %vm1284, %v1251, 0
        %v1292 = vsel %vm1284, %v1253, 0
        %v1295 = vsel %vm1284, %v1255, 0
        %v1298 = vsel %vm1284, %v1257, 0
        %v1301 = vsel %vm1284, %v1259, 0
        %v1304 = vsel %vm1284, %v1261, 0
        %v1307 = vsel %vm1284, %v1263, 0
        %v1310 = vsel %vm1284, %v1265, 0
        %1312 = vmatprep.subr.mxu0 0.0
        %1313 = vmatpush1.msra.mxu0 %v1266
        %1314 = vmatprep.subr.mxu0 0.0
        %1315 = vmatpush1.msra.mxu0 %v1267
        %1316 = vmatprep.subr.mxu0 0.0
        %1317 = vmatpush1.msra.mxu0 %v1268
        %1318 = vmatprep.subr.mxu0 0.0
        %1319 = vmatpush1.msra.mxu0 %v1269
        %1320 = vmatprep.subr.mxu0 0.0
        %1321 = vmatpush1.msra.mxu0 %v1270
        %1322 = vmatprep.subr.mxu0 0.0
        %1323 = vmatpush1.msra.mxu0 %v1271
        %1324 = vmatprep.subr.mxu0 0.0
        %1325 = vmatpush1.msra.mxu0 %v1272
        %1326 = vmatprep.subr.mxu0 0.0
        %1327 = vmatpush1.msra.mxu0 %v1273
        %1328 = vmatprep.subr.mxu0 0.0
        %1329 = vmatpush1.msra.mxu0 %v1274
        %1330 = vmatprep.subr.mxu0 0.0
        %1331 = vmatpush1.msra.mxu0 %v1275
        %1332 = vmatprep.subr.mxu0 0.0
        %1333 = vmatpush1.msra.mxu0 %v1276
        %1334 = vmatprep.subr.mxu0 0.0
        %1335 = vmatpush1.msra.mxu0 %v1277
        %1336 = vmatprep.subr.mxu0 0.0
        %1337 = vmatpush1.msra.mxu0 %v1278
        %1338 = vmatprep.subr.mxu0 0.0
        %1339 = vmatpush1.msra.mxu0 %v1279
        %1340 = vmatprep.subr.mxu0 0.0
        %1341 = vmatpush1.msra.mxu0 %v1280
        %1342 = vmatprep.subr.mxu0 0.0
        %1343 = vmatpush1.msra.mxu0 %v1281
        %1344 = vmatprep.subr.mxu0 0.0
        %1345 = vmatpush1.msra.mxu0 %v1282
        %1346 = vmatprep.subr.mxu0 0.0
        %1347 = vmatpush1.msra.mxu0 %v1283
        %1348 = vmatprep.subr.mxu0 0.0
        %1349 = vmatpush1.msra.mxu0 0.0
        %1350 = vmatprep.subr.mxu0 0.0
        %1351 = vmatpush1.msra.mxu0 0.0
        %1352 = vmatprep.subr.mxu0 0.0
        %1353 = vmatpush1.msra.mxu0 0.0
        %1354 = vmatprep.subr.mxu0 0.0
        %1355 = vmatpush1.msra.mxu0 0.0
        %1356 = vmatprep.subr.mxu0 0.0
        %1357 = vmatpush1.msra.mxu0 0.0
        %1358 = vmatprep.subr.mxu0 0.0
        %1359 = vmatpush1.msra.mxu0 0.0
        %1360 = vmatprep.subr.mxu0 0.0
        %1361 = vmatpush1.msra.mxu0 0.0
        %1362 = vmatprep.subr.mxu0 0.0
        %1363 = vmatpush1.msra.mxu0 0.0
        %1364 = vmatprep.subr.mxu0 0.0
        %1365 = vmatpush1.msra.mxu0 0.0
        %1366 = vmatprep.subr.mxu0 0.0
        %1367 = vmatpush1.msra.mxu0 0.0
        %1368 = vmatprep.subr.mxu0 0.0
        %1369 = vmatpush1.msra.mxu0 0.0
        %1370 = vmatprep.subr.mxu0 0.0
        %1371 = vmatpush1.msra.mxu0 0.0
        %1372 = vmatprep.subr.mxu0 0.0
        %1373 = vmatpush1.msra.mxu0 0.0
        %1374 = vmatprep.subr.mxu0 0.0
        %1375 = vmatpush1.msra.mxu0 0.0
        %1376 = vmatprep.mubr.f32.mxu0 %v1286
        %1377 = vmatmul.mubr.f32.gmra.mrb[0].mxu0 %v1248
        %v1378 = vpop.f32.mrb[0].mxu0
        %v1379 = vadd.f32 0.0, %v1378
        %v1380 = vpop.f32.mrb[0].mxu0
        %1381 = vmatprep.mubr.f32.mxu0 %v1289
        %1382 = vmatmul.mubr.f32.gmra.mrb[0].mxu0 %v1250
        %v1383 = vpop.f32.mrb[0].mxu0
        %v1384 = vadd.f32 0.0, %v1383
        %v1385 = vpop.f32.mrb[0].mxu0
        %1386 = vmatprep.mubr.f32.mxu0 %v1292
        %1387 = vmatmul.mubr.f32.gmra.mrb[0].mxu0 %v1252
        %v1388 = vpop.f32.mrb[0].mxu0
        %v1389 = vadd.f32 0.0, %v1388
        %v1390 = vpop.f32.mrb[0].mxu0
        %1391 = vmatprep.mubr.f32.mxu0 %v1295
        %1392 = vmatmul.mubr.f32.gmra.mrb[0].mxu0 %v1254
        %v1393 = vpop.f32.mrb[0].mxu0
        %v1394 = vadd.f32 0.0, %v1393
        %v1395 = vpop.f32.mrb[0].mxu0
        %1396 = vmatprep.mubr.f32.mxu0 %v1298
        %1397 = vmatmul.mubr.f32.gmra.mrb[0].mxu0 %v1256
        %v1398 = vpop.f32.mrb[0].mxu0
        %v1399 = vadd.f32 0.0, %v1398
        %v1400 = vpop.f32.mrb[0].mxu0
        %1401 = vmatprep.mubr.f32.mxu0 %v1301
        %1402 = vmatmul.mubr.f32.gmra.mrb[0].mxu0 %v1258
        %v1403 = vpop.f32.mrb[0].mxu0
        %v1404 = vadd.f32 0.0, %v1403
        %v1405 = vpop.f32.mrb[0].mxu0
        %1406 = vmatprep.mubr.f32.mxu0 %v1304
        %1407 = vmatmul.mubr.f32.gmra.mrb[0].mxu0 %v1260
        %v1408 = vpop.f32.mrb[0].mxu0
        %v1409 = vadd.f32 0.0, %v1408
        %v1410 = vpop.f32.mrb[0].mxu0
        %1411 = vmatprep.mubr.f32.mxu0 %v1307
        %1412 = vmatmul.mubr.f32.gmra.mrb[0].mxu0 %v1262
        %v1413 = vpop.f32.mrb[0].mxu0
        %v1414 = vadd.f32 0.0, %v1413
        %v1415 = vpop.f32.mrb[0].mxu0
        %1416 = vmatprep.mubr.f32.mxu0 %v1310
        %1417 = vmatmul.mubr.f32.gmra.mrb[0].mxu0 %v1264
        %v1418 = vpop.f32.mrb[0].mxu0
        %v1419 = vadd.f32 0.0, %v1418
        %v1420 = vpop.f32.mrb[0].mxu0
        %1421 = vdwg.mxu0
        %s1422 = scalar_lea.vmem %s3, 144
        %v1423 = vld [vmem:[%s1422] sm:$0xff]
        %v1424 = vld [vmem:[%s1422 + $0x8] sm:$0xff]
        %v1425 = vld [vmem:[%s1422 + $0x10] sm:$0xff]
        %v1426 = vld [vmem:[%s1422 + $0x18] sm:$0xff]
        %v1427 = vld [vmem:[%s1422 + $0x20] sm:$0xff]
        %v1428 = vld [vmem:[%s1422 + $0x28] sm:$0xff]
        %v1429 = vld [vmem:[%s1422 + $0x30] sm:$0xff]
        %v1430 = vld [vmem:[%s1422 + $0x38] sm:$0xff]
        %v1431 = vld [vmem:[%s1422 + $0x40] sm:$0xff]
        %v1432 = vld [vmem:[%s1422 + $0x48] sm:$0xff]
        %v1433 = vld [vmem:[%s1422 + $0x50] sm:$0xff]
        %v1434 = vld [vmem:[%s1422 + $0x58] sm:$0xff]
        %v1435 = vld [vmem:[%s1422 + $0x60] sm:$0xff]
        %v1436 = vld [vmem:[%s1422 + $0x68] sm:$0xff]
        %v1437 = vld [vmem:[%s1422 + $0x70] sm:$0xff]
        %v1438 = vld [vmem:[%s1422 + $0x78] sm:$0xff]
        %v1439 = vld [vmem:[%s1422 + $0x80] sm:$0xff]
        %v1440 = vld [vmem:[%s1422 + $0x88] sm:$0xff]
        %1441 = vmatprep.subr.mxu0 0.0
        %1442 = vmatpush1.msra.mxu0 %v1423
        %1443 = vmatprep.subr.mxu0 0.0
        %1444 = vmatpush1.msra.mxu0 %v1424
        %1445 = vmatprep.subr.mxu0 0.0
        %1446 = vmatpush1.msra.mxu0 %v1425
        %1447 = vmatprep.subr.mxu0 0.0
        %1448 = vmatpush1.msra.mxu0 %v1426
        %1449 = vmatprep.subr.mxu0 0.0
        %1450 = vmatpush1.msra.mxu0 %v1427
        %1451 = vmatprep.subr.mxu0 0.0
        %1452 = vmatpush1.msra.mxu0 %v1428
        %1453 = vmatprep.subr.mxu0 0.0
        %1454 = vmatpush1.msra.mxu0 %v1429
        %1455 = vmatprep.subr.mxu0 0.0
        %1456 = vmatpush1.msra.mxu0 %v1430
        %1457 = vmatprep.subr.mxu0 0.0
        %1458 = vmatpush1.msra.mxu0 %v1431
        %1459 = vmatprep.subr.mxu0 0.0
        %1460 = vmatpush1.msra.mxu0 %v1432
        %1461 = vmatprep.subr.mxu0 0.0
        %1462 = vmatpush1.msra.mxu0 %v1433
        %1463 = vmatprep.subr.mxu0 0.0
        %1464 = vmatpush1.msra.mxu0 %v1434
        %1465 = vmatprep.subr.mxu0 0.0
        %1466 = vmatpush1.msra.mxu0 %v1435
        %1467 = vmatprep.subr.mxu0 0.0
        %1468 = vmatpush1.msra.mxu0 %v1436
        %1469 = vmatprep.subr.mxu0 0.0
        %1470 = vmatpush1.msra.mxu0 %v1437
        %1471 = vmatprep.subr.mxu0 0.0
        %1472 = vmatpush1.msra.mxu0 %v1438
        %1473 = vmatprep.subr.mxu0 0.0
        %1474 = vmatpush1.msra.mxu0 %v1439
        %1475 = vmatprep.subr.mxu0 0.0
        %1476 = vmatpush1.msra.mxu0 %v1440
        %1477 = vmatprep.subr.mxu0 0.0
        %1478 = vmatpush1.msra.mxu0 0.0
        %1479 = vmatprep.subr.mxu0 0.0
        %1480 = vmatpush1.msra.mxu0 0.0
        %1481 = vmatprep.subr.mxu0 0.0
        %1482 = vmatpush1.msra.mxu0 0.0
        %1483 = vmatprep.subr.mxu0 0.0
        %1484 = vmatpush1.msra.mxu0 0.0
        %1485 = vmatprep.subr.mxu0 0.0
        %1486 = vmatpush1.msra.mxu0 0.0
        %1487 = vmatprep.subr.mxu0 0.0
        %1488 = vmatpush1.msra.mxu0 0.0
        %1489 = vmatprep.subr.mxu0 0.0
        %1490 = vmatpush1.msra.mxu0 0.0
        %1491 = vmatprep.subr.mxu0 0.0
        %1492 = vmatpush1.msra.mxu0 0.0
        %1493 = vmatprep.subr.mxu0 0.0
        %1494 = vmatpush1.msra.mxu0 0.0
        %1495 = vmatprep.subr.mxu0 0.0
        %1496 = vmatpush1.msra.mxu0 0.0
        %1497 = vmatprep.subr.mxu0 0.0
        %1498 = vmatpush1.msra.mxu0 0.0
        %1499 = vmatprep.subr.mxu0 0.0
        %1500 = vmatpush1.msra.mxu0 0.0
        %1501 = vmatprep.subr.mxu0 0.0
        %1502 = vmatpush1.msra.mxu0 0.0
        %1503 = vmatprep.subr.mxu0 0.0
        %1504 = vmatpush1.msra.mxu0 0.0
        %1505 = vmatprep.mubr.f32.mxu0 %v1286
        %1506 = vmatmul.mubr.f32.gmra.mrb[0].mxu0 %v1248
        %v1507 = vpop.f32.mrb[0].mxu0
        %v1508 = vadd.f32 0.0, %v1507
        %v1509 = vpop.f32.mrb[0].mxu0
        %1510 = vmatprep.mubr.f32.mxu0 %v1289
        %1511 = vmatmul.mubr.f32.gmra.mrb[0].mxu0 %v1250
        %v1512 = vpop.f32.mrb[0].mxu0
        %v1513 = vadd.f32 0.0, %v1512
        %v1514 = vpop.f32.mrb[0].mxu0
        %1515 = vmatprep.mubr.f32.mxu0 %v1292
        %1516 = vmatmul.mubr.f32.gmra.mrb[0].mxu0 %v1252
        %v1517 = vpop.f32.mrb[0].mxu0
        %v1518 = vadd.f32 0.0, %v1517
        %v1519 = vpop.f32.mrb[0].mxu0
        %1520 = vmatprep.mubr.f32.mxu0 %v1295
        %1521 = vmatmul.mubr.f32.gmra.mrb[0].mxu0 %v1254
        %v1522 = vpop.f32.mrb[0].mxu0
        %v1523 = vadd.f32 0.0, %v1522
        %v1524 = vpop.f32.mrb[0].mxu0
        %1525 = vmatprep.mubr.f32.mxu0 %v1298
        %1526 = vmatmul.mubr.f32.gmra.mrb[0].mxu0 %v1256
        %v1527 = vpop.f32.mrb[0].mxu0
        %v1528 = vadd.f32 0.0, %v1527
        %v1529 = vpop.f32.mrb[0].mxu0
        %1530 = vmatprep.mubr.f32.mxu0 %v1301
        %1531 = vmatmul.mubr.f32.gmra.mrb[0].mxu0 %v1258
        %v1532 = vpop.f32.mrb[0].mxu0
        %v1533 = vadd.f32 0.0, %v1532
        %v1534 = vpop.f32.mrb[0].mxu0
        %1535 = vmatprep.mubr.f32.mxu0 %v1304
        %1536 = vmatmul.mubr.f32.gmra.mrb[0].mxu0 %v1260
        %v1537 = vpop.f32.mrb[0].mxu0
        %v1538 = vadd.f32 0.0, %v1537
        %v1539 = vpop.f32.mrb[0].mxu0
        %1540 = vmatprep.mubr.f32.mxu0 %v1307
        %1541 = vmatmul.mubr.f32.gmra.mrb[0].mxu0 %v1262
        %v1542 = vpop.f32.mrb[0].mxu0
        %v1543 = vadd.f32 0.0, %v1542
        %v1544 = vpop.f32.mrb[0].mxu0
        %1545 = vmatprep.mubr.f32.mxu0 %v1310
        %1546 = vmatmul.mubr.f32.gmra.mrb[0].mxu0 %v1264
        %v1547 = vpop.f32.mrb[0].mxu0
        %v1548 = vadd.f32 0.0, %v1547
        %v1549 = vpop.f32.mrb[0].mxu0
        %1550 = vdwg.mxu0
        %v1551 = vmax.f32 %v1379, %v1508
        %v1552 = vmax.f32 %v1384, %v1513
        %v1553 = vmax.f32 %v1389, %v1518
        %v1554 = vmax.f32 %v1394, %v1523
        %v1555 = vmax.f32 %v1399, %v1528
        %v1556 = vmax.f32 %v1404, %v1533
        %v1557 = vmax.f32 %v1409, %v1538
        %v1558 = vmax.f32 %v1414, %v1543
        %v1559 = vmax.f32 %v1419, %v1548
        %v1560 = vmax.f32 %v1551, 0.0
        %v1561 = vmax.f32 %v1552, 0.0
        %v1562 = vmax.f32 %v1553, 0.0
        %v1563 = vmax.f32 %v1554, 0.0
        %v1564 = vmax.f32 %v1555, 0.0
        %v1565 = vmax.f32 %v1556, 0.0
        %v1566 = vmax.f32 %v1557, 0.0
        %v1567 = vmax.f32 %v1558, 0.0
        %v1568 = vmax.f32 %v1559, 0.0
        %v1569 = vld [vmem:[%s4] sm:$0xff]
        %v1570 = vld [vmem:[%s4 + $0x8] sm:$0xff]
        %v1571 = vld [vmem:[%s4 + $0x10] sm:$0xff]
        %v1572 = vld [vmem:[%s4 + $0x18] sm:$0xff]
        %v1573 = vld [vmem:[%s4 + $0x20] sm:$0xff]
        %v1574 = vld [vmem:[%s4 + $0x28] sm:$0xff]
        %v1575 = vld [vmem:[%s4 + $0x30] sm:$0xff]
        %v1576 = vld [vmem:[%s4 + $0x38] sm:$0xff]
        %v1577 = vld [vmem:[%s4 + $0x40] sm:$0xff]
        %s1578 = scalar_lea.vmem %s4, 72
        %v1579 = vld [vmem:[%s1578] sm:$0xff]
        %v1580 = vld [vmem:[%s1578 + $0x8] sm:$0xff]
        %v1581 = vld [vmem:[%s1578 + $0x10] sm:$0xff]
        %v1582 = vld [vmem:[%s1578 + $0x18] sm:$0xff]
        %v1583 = vld [vmem:[%s1578 + $0x20] sm:$0xff]
        %v1584 = vld [vmem:[%s1578 + $0x28] sm:$0xff]
        %v1585 = vld [vmem:[%s1578 + $0x30] sm:$0xff]
        %v1586 = vld [vmem:[%s1578 + $0x38] sm:$0xff]
        %v1587 = vld [vmem:[%s1578 + $0x40] sm:$0xff]
        %vm1588 = vcmask 588800
        %v1590 = vsel %vm1588, %v1561, 0
        %v1593 = vsel %vm1588, %v1562, 0
        %v1596 = vsel %vm1588, %v1563, 0
        %v1599 = vsel %vm1588, %v1564, 0
        %v1602 = vsel %vm1588, %v1565, 0
        %1604 = vmatprep.subr.mxu0 0.0
        %1605 = vmatpush1.msra.mxu0 %v1579
        %1606 = vmatprep.subr.mxu0 0.0
        %1607 = vmatpush1.msra.mxu0 %v1580
        %1608 = vmatprep.subr.mxu0 0.0
        %1609 = vmatpush1.msra.mxu0 %v1581
        %1610 = vmatprep.subr.mxu0 0.0
        %1611 = vmatpush1.msra.mxu0 %v1582
        %1612 = vmatprep.subr.mxu0 0.0
        %1613 = vmatpush1.msra.mxu0 %v1583
        %1614 = vmatprep.subr.mxu0 0.0
        %1615 = vmatpush1.msra.mxu0 %v1584
        %1616 = vmatprep.subr.mxu0 0.0
        %1617 = vmatpush1.msra.mxu0 %v1585
        %1618 = vmatprep.subr.mxu0 0.0
        %1619 = vmatpush1.msra.mxu0 %v1586
        %1620 = vmatprep.subr.mxu0 0.0
        %1621 = vmatpush1.msra.mxu0 %v1587
        %1622 = vmatprep.subr.mxu0 0.0
        %1623 = vmatpush1.msra.mxu0 0.0
        %1624 = vmatprep.subr.mxu0 0.0
        %1625 = vmatpush1.msra.mxu0 0.0
        %1626 = vmatprep.subr.mxu0 0.0
        %1627 = vmatpush1.msra.mxu0 0.0
        %1628 = vmatprep.subr.mxu0 0.0
        %1629 = vmatpush1.msra.mxu0 0.0
        %1630 = vmatprep.subr.mxu0 0.0
        %1631 = vmatpush1.msra.mxu0 0.0
        %1632 = vmatprep.subr.mxu0 0.0
        %1633 = vmatpush1.msra.mxu0 0.0
        %1634 = vmatprep.subr.mxu0 0.0
        %1635 = vmatpush1.msra.mxu0 0.0
        %1636 = vmatprep.subr.mxu0 0.0
        %1637 = vmatpush1.msra.mxu0 0.0
        %1638 = vmatprep.subr.mxu0 0.0
        %1639 = vmatpush1.msra.mxu0 0.0
        %1640 = vmatprep.subr.mxu0 0.0
        %1641 = vmatpush1.msra.mxu0 0.0
        %1642 = vmatprep.subr.mxu0 0.0
        %1643 = vmatpush1.msra.mxu0 0.0
        %1644 = vmatprep.subr.mxu0 0.0
        %1645 = vmatpush1.msra.mxu0 0.0
        %1646 = vmatprep.subr.mxu0 0.0
        %1647 = vmatpush1.msra.mxu0 0.0
        %1648 = vmatprep.subr.mxu0 0.0
        %1649 = vmatpush1.msra.mxu0 0.0
        %1650 = vmatprep.subr.mxu0 0.0
        %1651 = vmatpush1.msra.mxu0 0.0
        %1652 = vmatprep.subr.mxu0 0.0
        %1653 = vmatpush1.msra.mxu0 0.0
        %1654 = vmatprep.subr.mxu0 0.0
        %1655 = vmatpush1.msra.mxu0 0.0
        %1656 = vmatprep.subr.mxu0 0.0
        %1657 = vmatpush1.msra.mxu0 0.0
        %1658 = vmatprep.subr.mxu0 0.0
        %1659 = vmatpush1.msra.mxu0 0.0
        %1660 = vmatprep.subr.mxu0 0.0
        %1661 = vmatpush1.msra.mxu0 0.0
        %1662 = vmatprep.subr.mxu0 0.0
        %1663 = vmatpush1.msra.mxu0 0.0
        %1664 = vmatprep.subr.mxu0 0.0
        %1665 = vmatpush1.msra.mxu0 0.0
        %1666 = vmatprep.subr.mxu0 0.0
        %1667 = vmatpush1.msra.mxu0 0.0
        %1668 = vmatprep.mubr.f32.mxu0 0.0
        %1669 = vmatmul.mubr.f32.gmra.mrb[0].mxu0 %v1590
        %v1670 = vpop.f32.mrb[0].mxu0
        %v1671 = vadd.f32 0.0, %v1670
        %v1672 = vpop.f32.mrb[0].mxu0
        %1673 = vmatprep.mubr.f32.mxu0 0.0
        %1674 = vmatmul.mubr.f32.gmra.mrb[0].mxu0 %v1593
        %v1675 = vpop.f32.mrb[0].mxu0
        %v1676 = vadd.f32 0.0, %v1675
        %v1677 = vpop.f32.mrb[0].mxu0
        %1678 = vmatprep.mubr.f32.mxu0 0.0
        %1679 = vmatmul.mubr.f32.gmra.mrb[0].mxu0 %v1596
        %v1680 = vpop.f32.mrb[0].mxu0
        %v1681 = vadd.f32 0.0, %v1680
        %v1682 = vpop.f32.mrb[0].mxu0
        %1683 = vmatprep.mubr.f32.mxu0 0.0
        %1684 = vmatmul.mubr.f32.gmra.mrb[0].mxu0 %v1599
        %v1685 = vpop.f32.mrb[0].mxu0
        %v1686 = vadd.f32 0.0, %v1685
        %v1687 = vpop.f32.mrb[0].mxu0
        %1688 = vmatprep.mubr.f32.mxu0 0.0
        %1689 = vmatmul.mubr.f32.gmra.mrb[0].mxu0 %v1602
        %v1690 = vpop.f32.mrb[0].mxu0
        %v1691 = vpop.f32.mrb[0].mxu0
        %1692 = vdwg.mxu0
        %v1694 = vsel %vm1588, %v1560, 0
        %1696 = vmatprep.subr.mxu0 0.0
        %1697 = vmatpush1.msra.mxu0 %v1569
        %1698 = vmatprep.subr.mxu0 0.0
        %1699 = vmatpush1.msra.mxu0 %v1570
        %1700 = vmatprep.subr.mxu0 0.0
        %1701 = vmatpush1.msra.mxu0 %v1571
        %1702 = vmatprep.subr.mxu0 0.0
        %1703 = vmatpush1.msra.mxu0 %v1572
        %1704 = vmatprep.subr.mxu0 0.0
        %1705 = vmatpush1.msra.mxu0 %v1573
        %1706 = vmatprep.subr.mxu0 0.0
        %1707 = vmatpush1.msra.mxu0 %v1574
        %1708 = vmatprep.subr.mxu0 0.0
        %1709 = vmatpush1.msra.mxu0 %v1575
        %1710 = vmatprep.subr.mxu0 0.0
        %1711 = vmatpush1.msra.mxu0 %v1576
        %1712 = vmatprep.subr.mxu0 0.0
        %1713 = vmatpush1.msra.mxu0 %v1577
        %1714 = vmatprep.subr.mxu0 0.0
        %1715 = vmatpush1.msra.mxu0 0.0
        %1716 = vmatprep.subr.mxu0 0.0
        %1717 = vmatpush1.msra.mxu0 0.0
        %1718 = vmatprep.subr.mxu0 0.0
        %1719 = vmatpush1.msra.mxu0 0.0
        %1720 = vmatprep.subr.mxu0 0.0
        %1721 = vmatpush1.msra.mxu0 0.0
        %1722 = vmatprep.subr.mxu0 0.0
        %1723 = vmatpush1.msra.mxu0 0.0
        %1724 = vmatprep.subr.mxu0 0.0
        %1725 = vmatpush1.msra.mxu0 0.0
        %1726 = vmatprep.subr.mxu0 0.0
        %1727 = vmatpush1.msra.mxu0 0.0
        %1728 = vmatprep.subr.mxu0 0.0
        %1729 = vmatpush1.msra.mxu0 0.0
        %1730 = vmatprep.subr.mxu0 0.0
        %1731 = vmatpush1.msra.mxu0 0.0
        %1732 = vmatprep.subr.mxu0 0.0
        %1733 = vmatpush1.msra.mxu0 0.0
        %1734 = vmatprep.subr.mxu0 0.0
        %1735 = vmatpush1.msra.mxu0 0.0
        %1736 = vmatprep.subr.mxu0 0.0
        %1737 = vmatpush1.msra.mxu0 0.0
        %1738 = vmatprep.subr.mxu0 0.0
        %1739 = vmatpush1.msra.mxu0 0.0
        %1740 = vmatprep.subr.mxu0 0.0
        %1741 = vmatpush1.msra.mxu0 0.0
        %1742 = vmatprep.subr.mxu0 0.0
        %1743 = vmatpush1.msra.mxu0 0.0
        %1744 = vmatprep.subr.mxu0 0.0
        %1745 = vmatpush1.msra.mxu0 0.0
        %1746 = vmatprep.subr.mxu0 0.0
        %1747 = vmatpush1.msra.mxu0 0.0
        %1748 = vmatprep.subr.mxu0 0.0
        %1749 = vmatpush1.msra.mxu0 0.0
        %1750 = vmatprep.subr.mxu0 0.0
        %1751 = vmatpush1.msra.mxu0 0.0
        %1752 = vmatprep.subr.mxu0 0.0
        %1753 = vmatpush1.msra.mxu0 0.0
        %1754 = vmatprep.subr.mxu0 0.0
        %1755 = vmatpush1.msra.mxu0 0.0
        %1756 = vmatprep.subr.mxu0 0.0
        %1757 = vmatpush1.msra.mxu0 0.0
        %1758 = vmatprep.subr.mxu0 0.0
        %1759 = vmatpush1.msra.mxu0 0.0
        %1760 = vmatprep.mubr.f32.mxu0 0.0
        %1761 = vmatmul.mubr.f32.gmra.mrb[0].mxu0 %v1694
        %v1762 = vpop.f32.mrb[0].mxu0
        %v1763 = vadd.f32 %v1671, %v1762
        %v1764 = vpop.f32.mrb[0].mxu0
        %1765 = vmatprep.mubr.f32.mxu0 0.0
        %1766 = vmatmul.mubr.f32.gmra.mrb[0].mxu0 %v1590
        %v1767 = vpop.f32.mrb[0].mxu0
        %v1768 = vadd.f32 %v1676, %v1767
        %v1769 = vpop.f32.mrb[0].mxu0
        %1770 = vmatprep.mubr.f32.mxu0 0.0
        %1771 = vmatmul.mubr.f32.gmra.mrb[0].mxu0 %v1593
        %v1772 = vpop.f32.mrb[0].mxu0
        %v1773 = vadd.f32 %v1681, %v1772
        %v1774 = vpop.f32.mrb[0].mxu0
        %1775 = vmatprep.mubr.f32.mxu0 0.0
        %1776 = vmatmul.mubr.f32.gmra.mrb[0].mxu0 %v1596
        %v1777 = vpop.f32.mrb[0].mxu0
        %v1778 = vadd.f32 %v1686, %v1777
        %v1779 = vpop.f32.mrb[0].mxu0
        %1780 = vmatprep.mubr.f32.mxu0 0.0
        %1781 = vmatmul.mubr.f32.gmra.mrb[0].mxu0 %v1599
        %v1782 = vpop.f32.mrb[0].mxu0
        %v1783 = vpop.f32.mrb[0].mxu0
        %1784 = vdwg.mxu0
        %s1785 = scalar_lea.vmem %s4, 144
        %v1786 = vld [vmem:[%s1785] sm:$0xff]
        %v1787 = vld [vmem:[%s1785 + $0x8] sm:$0xff]
        %v1788 = vld [vmem:[%s1785 + $0x10] sm:$0xff]
        %v1789 = vld [vmem:[%s1785 + $0x18] sm:$0xff]
        %v1790 = vld [vmem:[%s1785 + $0x20] sm:$0xff]
        %v1791 = vld [vmem:[%s1785 + $0x28] sm:$0xff]
        %v1792 = vld [vmem:[%s1785 + $0x30] sm:$0xff]
        %v1793 = vld [vmem:[%s1785 + $0x38] sm:$0xff]
        %v1794 = vld [vmem:[%s1785 + $0x40] sm:$0xff]
        %v1796 = vsel %vm1588, %v1566, 0
        %1798 = vmatprep.subr.mxu0 0.0
        %1799 = vmatpush1.msra.mxu0 %v1786
        %1800 = vmatprep.subr.mxu0 0.0
        %1801 = vmatpush1.msra.mxu0 %v1787
        %1802 = vmatprep.subr.mxu0 0.0
        %1803 = vmatpush1.msra.mxu0 %v1788
        %1804 = vmatprep.subr.mxu0 0.0
        %1805 = vmatpush1.msra.mxu0 %v1789
        %1806 = vmatprep.subr.mxu0 0.0
        %1807 = vmatpush1.msra.mxu0 %v1790
        %1808 = vmatprep.subr.mxu0 0.0
        %1809 = vmatpush1.msra.mxu0 %v1791
        %1810 = vmatprep.subr.mxu0 0.0
        %1811 = vmatpush1.msra.mxu0 %v1792
        %1812 = vmatprep.subr.mxu0 0.0
        %1813 = vmatpush1.msra.mxu0 %v1793
        %1814 = vmatprep.subr.mxu0 0.0
        %1815 = vmatpush1.msra.mxu0 %v1794
        %1816 = vmatprep.subr.mxu0 0.0
        %1817 = vmatpush1.msra.mxu0 0.0
        %1818 = vmatprep.subr.mxu0 0.0
        %1819 = vmatpush1.msra.mxu0 0.0
        %1820 = vmatprep.subr.mxu0 0.0
        %1821 = vmatpush1.msra.mxu0 0.0
        %1822 = vmatprep.subr.mxu0 0.0
        %1823 = vmatpush1.msra.mxu0 0.0
        %1824 = vmatprep.subr.mxu0 0.0
        %1825 = vmatpush1.msra.mxu0 0.0
        %1826 = vmatprep.subr.mxu0 0.0
        %1827 = vmatpush1.msra.mxu0 0.0
        %1828 = vmatprep.subr.mxu0 0.0
        %1829 = vmatpush1.msra.mxu0 0.0
        %1830 = vmatprep.subr.mxu0 0.0
        %1831 = vmatpush1.msra.mxu0 0.0
        %1832 = vmatprep.subr.mxu0 0.0
        %1833 = vmatpush1.msra.mxu0 0.0
        %1834 = vmatprep.subr.mxu0 0.0
        %1835 = vmatpush1.msra.mxu0 0.0
        %1836 = vmatprep.subr.mxu0 0.0
        %1837 = vmatpush1.msra.mxu0 0.0
        %1838 = vmatprep.subr.mxu0 0.0
        %1839 = vmatpush1.msra.mxu0 0.0
        %1840 = vmatprep.subr.mxu0 0.0
        %1841 = vmatpush1.msra.mxu0 0.0
        %1842 = vmatprep.subr.mxu0 0.0
        %1843 = vmatpush1.msra.mxu0 0.0
        %1844 = vmatprep.subr.mxu0 0.0
        %1845 = vmatpush1.msra.mxu0 0.0
        %1846 = vmatprep.subr.mxu0 0.0
        %1847 = vmatpush1.msra.mxu0 0.0
        %1848 = vmatprep.subr.mxu0 0.0
        %1849 = vmatpush1.msra.mxu0 0.0
        %1850 = vmatprep.subr.mxu0 0.0
        %1851 = vmatpush1.msra.mxu0 0.0
        %1852 = vmatprep.subr.mxu0 0.0
        %1853 = vmatpush1.msra.mxu0 0.0
        %1854 = vmatprep.subr.mxu0 0.0
        %1855 = vmatpush1.msra.mxu0 0.0
        %1856 = vmatprep.subr.mxu0 0.0
        %1857 = vmatpush1.msra.mxu0 0.0
        %1858 = vmatprep.subr.mxu0 0.0
        %1859 = vmatpush1.msra.mxu0 0.0
        %1860 = vmatprep.subr.mxu0 0.0
        %1861 = vmatpush1.msra.mxu0 0.0
        %1862 = vmatprep.mubr.f32.mxu0 0.0
        %1863 = vmatmul.mubr.f32.gmra.mrb[0].mxu0 %v1593
        %v1864 = vpop.f32.mrb[0].mxu0
        %v1865 = vadd.f32 0.0, %v1864
        %v1866 = vpop.f32.mrb[0].mxu0
        %1867 = vmatprep.mubr.f32.mxu0 0.0
        %1868 = vmatmul.mubr.f32.gmra.mrb[0].mxu0 %v1596
        %v1869 = vpop.f32.mrb[0].mxu0
        %v1870 = vadd.f32 0.0, %v1869
        %v1871 = vpop.f32.mrb[0].mxu0
        %1872 = vmatprep.mubr.f32.mxu0 0.0
        %1873 = vmatmul.mubr.f32.gmra.mrb[0].mxu0 %v1599
        %v1874 = vpop.f32.mrb[0].mxu0
        %v1875 = vadd.f32 0.0, %v1874
        %v1876 = vpop.f32.mrb[0].mxu0
        %1877 = vmatprep.mubr.f32.mxu0 0.0
        %1878 = vmatmul.mubr.f32.gmra.mrb[0].mxu0 %v1602
        %v1879 = vpop.f32.mrb[0].mxu0
        %v1880 = vadd.f32 0.0, %v1879
        %v1881 = vpop.f32.mrb[0].mxu0
        %1882 = vmatprep.mubr.f32.mxu0 0.0
        %1883 = vmatmul.mubr.f32.gmra.mrb[0].mxu0 %v1796
        %v1884 = vpop.f32.mrb[0].mxu0
        %v1885 = vpop.f32.mrb[0].mxu0
        %1886 = vdwg.mxu0
        %v1887 = vadd.f32 %v1763, %v1865
        %v1888 = vadd.f32 %v1768, %v1870
        %v1889 = vadd.f32 %v1773, %v1875
        %v1890 = vadd.f32 %v1778, %v1880
        %s1891 = scalar_lea.vmem %s4, 216
        %v1892 = vld [vmem:[%s1891] sm:$0xff]
        %v1893 = vld [vmem:[%s1891 + $0x8] sm:$0xff]
        %v1894 = vld [vmem:[%s1891 + $0x10] sm:$0xff]
        %v1895 = vld [vmem:[%s1891 + $0x18] sm:$0xff]
        %v1896 = vld [vmem:[%s1891 + $0x20] sm:$0xff]
        %v1897 = vld [vmem:[%s1891 + $0x28] sm:$0xff]
        %v1898 = vld [vmem:[%s1891 + $0x30] sm:$0xff]
        %v1899 = vld [vmem:[%s1891 + $0x38] sm:$0xff]
        %v1900 = vld [vmem:[%s1891 + $0x40] sm:$0xff]
        %v1902 = vsel %vm1588, %v1567, 0
        %1904 = vmatprep.subr.mxu0 0.0
        %1905 = vmatpush1.msra.mxu0 %v1892
        %1906 = vmatprep.subr.mxu0 0.0
        %1907 = vmatpush1.msra.mxu0 %v1893
        %1908 = vmatprep.subr.mxu0 0.0
        %1909 = vmatpush1.msra.mxu0 %v1894
        %1910 = vmatprep.subr.mxu0 0.0
        %1911 = vmatpush1.msra.mxu0 %v1895
        %1912 = vmatprep.subr.mxu0 0.0
        %1913 = vmatpush1.msra.mxu0 %v1896
        %1914 = vmatprep.subr.mxu0 0.0
        %1915 = vmatpush1.msra.mxu0 %v1897
        %1916 = vmatprep.subr.mxu0 0.0
        %1917 = vmatpush1.msra.mxu0 %v1898
        %1918 = vmatprep.subr.mxu0 0.0
        %1919 = vmatpush1.msra.mxu0 %v1899
        %1920 = vmatprep.subr.mxu0 0.0
        %1921 = vmatpush1.msra.mxu0 %v1900
        %1922 = vmatprep.subr.mxu0 0.0
        %1923 = vmatpush1.msra.mxu0 0.0
        %1924 = vmatprep.subr.mxu0 0.0
        %1925 = vmatpush1.msra.mxu0 0.0
        %1926 = vmatprep.subr.mxu0 0.0
        %1927 = vmatpush1.msra.mxu0 0.0
        %1928 = vmatprep.subr.mxu0 0.0
        %1929 = vmatpush1.msra.mxu0 0.0
        %1930 = vmatprep.subr.mxu0 0.0
        %1931 = vmatpush1.msra.mxu0 0.0
        %1932 = vmatprep.subr.mxu0 0.0
        %1933 = vmatpush1.msra.mxu0 0.0
        %1934 = vmatprep.subr.mxu0 0.0
        %1935 = vmatpush1.msra.mxu0 0.0
        %1936 = vmatprep.subr.mxu0 0.0
        %1937 = vmatpush1.msra.mxu0 0.0
        %1938 = vmatprep.subr.mxu0 0.0
        %1939 = vmatpush1.msra.mxu0 0.0
        %1940 = vmatprep.subr.mxu0 0.0
        %1941 = vmatpush1.msra.mxu0 0.0
        %1942 = vmatprep.subr.mxu0 0.0
        %1943 = vmatpush1.msra.mxu0 0.0
        %1944 = vmatprep.subr.mxu0 0.0
        %1945 = vmatpush1.msra.mxu0 0.0
        %1946 = vmatprep.subr.mxu0 0.0
        %1947 = vmatpush1.msra.mxu0 0.0
        %1948 = vmatprep.subr.mxu0 0.0
        %1949 = vmatpush1.msra.mxu0 0.0
        %1950 = vmatprep.subr.mxu0 0.0
        %1951 = vmatpush1.msra.mxu0 0.0
        %1952 = vmatprep.subr.mxu0 0.0
        %1953 = vmatpush1.msra.mxu0 0.0
        %1954 = vmatprep.subr.mxu0 0.0
        %1955 = vmatpush1.msra.mxu0 0.0
        %1956 = vmatprep.subr.mxu0 0.0
        %1957 = vmatpush1.msra.mxu0 0.0
        %1958 = vmatprep.subr.mxu0 0.0
        %1959 = vmatpush1.msra.mxu0 0.0
        %1960 = vmatprep.subr.mxu0 0.0
        %1961 = vmatpush1.msra.mxu0 0.0
        %1962 = vmatprep.subr.mxu0 0.0
        %1963 = vmatpush1.msra.mxu0 0.0
        %1964 = vmatprep.subr.mxu0 0.0
        %1965 = vmatpush1.msra.mxu0 0.0
        %1966 = vmatprep.subr.mxu0 0.0
        %1967 = vmatpush1.msra.mxu0 0.0
        %1968 = vmatprep.mubr.f32.mxu0 0.0
        %1969 = vmatmul.mubr.f32.gmra.mrb[0].mxu0 %v1596
        %v1970 = vpop.f32.mrb[0].mxu0
        %v1971 = vadd.f32 0.0, %v1970
        %v1972 = vpop.f32.mrb[0].mxu0
        %1973 = vmatprep.mubr.f32.mxu0 0.0
        %1974 = vmatmul.mubr.f32.gmra.mrb[0].mxu0 %v1599
        %v1975 = vpop.f32.mrb[0].mxu0
        %v1976 = vadd.f32 0.0, %v1975
        %v1977 = vpop.f32.mrb[0].mxu0
        %1978 = vmatprep.mubr.f32.mxu0 0.0
        %1979 = vmatmul.mubr.f32.gmra.mrb[0].mxu0 %v1602
        %v1980 = vpop.f32.mrb[0].mxu0
        %v1981 = vadd.f32 0.0, %v1980
        %v1982 = vpop.f32.mrb[0].mxu0
        %1983 = vmatprep.mubr.f32.mxu0 0.0
        %1984 = vmatmul.mubr.f32.gmra.mrb[0].mxu0 %v1796
        %v1985 = vpop.f32.mrb[0].mxu0
        %v1986 = vadd.f32 0.0, %v1985
        %v1987 = vpop.f32.mrb[0].mxu0
        %1988 = vmatprep.mubr.f32.mxu0 0.0
        %1989 = vmatmul.mubr.f32.gmra.mrb[0].mxu0 %v1902
        %v1990 = vpop.f32.mrb[0].mxu0
        %v1991 = vpop.f32.mrb[0].mxu0
        %1992 = vdwg.mxu0
        %v1993 = vadd.f32 %v1887, %v1971
        %v1994 = vadd.f32 %v1888, %v1976
        %v1995 = vadd.f32 %v1889, %v1981
        %v1996 = vadd.f32 %v1890, %v1986
        %s1997 = scalar_lea.vmem %s4, 288
        %v1998 = vld [vmem:[%s1997] sm:$0xff]
        %v1999 = vld [vmem:[%s1997 + $0x8] sm:$0xff]
        %v2000 = vld [vmem:[%s1997 + $0x10] sm:$0xff]
        %v2001 = vld [vmem:[%s1997 + $0x18] sm:$0xff]
        %v2002 = vld [vmem:[%s1997 + $0x20] sm:$0xff]
        %v2003 = vld [vmem:[%s1997 + $0x28] sm:$0xff]
        %v2004 = vld [vmem:[%s1997 + $0x30] sm:$0xff]
        %v2005 = vld [vmem:[%s1997 + $0x38] sm:$0xff]
        %v2006 = vld [vmem:[%s1997 + $0x40] sm:$0xff]
        %v2008 = vsel %vm1588, %v1568, 0
        %2010 = vmatprep.subr.mxu0 0.0
        %2011 = vmatpush1.msra.mxu0 %v1998
        %2012 = vmatprep.subr.mxu0 0.0
        %2013 = vmatpush1.msra.mxu0 %v1999
        %2014 = vmatprep.subr.mxu0 0.0
        %2015 = vmatpush1.msra.mxu0 %v2000
        %2016 = vmatprep.subr.mxu0 0.0
        %2017 = vmatpush1.msra.mxu0 %v2001
        %2018 = vmatprep.subr.mxu0 0.0
        %2019 = vmatpush1.msra.mxu0 %v2002
        %2020 = vmatprep.subr.mxu0 0.0
        %2021 = vmatpush1.msra.mxu0 %v2003
        %2022 = vmatprep.subr.mxu0 0.0
        %2023 = vmatpush1.msra.mxu0 %v2004
        %2024 = vmatprep.subr.mxu0 0.0
        %2025 = vmatpush1.msra.mxu0 %v2005
        %2026 = vmatprep.subr.mxu0 0.0
        %2027 = vmatpush1.msra.mxu0 %v2006
        %2028 = vmatprep.subr.mxu0 0.0
        %2029 = vmatpush1.msra.mxu0 0.0
        %2030 = vmatprep.subr.mxu0 0.0
        %2031 = vmatpush1.msra.mxu0 0.0
        %2032 = vmatprep.subr.mxu0 0.0
        %2033 = vmatpush1.msra.mxu0 0.0
        %2034 = vmatprep.subr.mxu0 0.0
        %2035 = vmatpush1.msra.mxu0 0.0
        %2036 = vmatprep.subr.mxu0 0.0
        %2037 = vmatpush1.msra.mxu0 0.0
        %2038 = vmatprep.subr.mxu0 0.0
        %2039 = vmatpush1.msra.mxu0 0.0
        %2040 = vmatprep.subr.mxu0 0.0
        %2041 = vmatpush1.msra.mxu0 0.0
        %2042 = vmatprep.subr.mxu0 0.0
        %2043 = vmatpush1.msra.mxu0 0.0
        %2044 = vmatprep.subr.mxu0 0.0
        %2045 = vmatpush1.msra.mxu0 0.0
        %2046 = vmatprep.subr.mxu0 0.0
        %2047 = vmatpush1.msra.mxu0 0.0
        %2048 = vmatprep.subr.mxu0 0.0
        %2049 = vmatpush1.msra.mxu0 0.0
        %2050 = vmatprep.subr.mxu0 0.0
        %2051 = vmatpush1.msra.mxu0 0.0
        %2052 = vmatprep.subr.mxu0 0.0
        %2053 = vmatpush1.msra.mxu0 0.0
        %2054 = vmatprep.subr.mxu0 0.0
        %2055 = vmatpush1.msra.mxu0 0.0
        %2056 = vmatprep.subr.mxu0 0.0
        %2057 = vmatpush1.msra.mxu0 0.0
        %2058 = vmatprep.subr.mxu0 0.0
        %2059 = vmatpush1.msra.mxu0 0.0
        %2060 = vmatprep.subr.mxu0 0.0
        %2061 = vmatpush1.msra.mxu0 0.0
        %2062 = vmatprep.subr.mxu0 0.0
        %2063 = vmatpush1.msra.mxu0 0.0
        %2064 = vmatprep.subr.mxu0 0.0
        %2065 = vmatpush1.msra.mxu0 0.0
        %2066 = vmatprep.subr.mxu0 0.0
        %2067 = vmatpush1.msra.mxu0 0.0
        %2068 = vmatprep.subr.mxu0 0.0
        %2069 = vmatpush1.msra.mxu0 0.0
        %2070 = vmatprep.subr.mxu0 0.0
        %2071 = vmatpush1.msra.mxu0 0.0
        %2072 = vmatprep.subr.mxu0 0.0
        %2073 = vmatpush1.msra.mxu0 0.0
        %2074 = vmatprep.mubr.f32.mxu0 0.0
        %2075 = vmatmul.mubr.f32.gmra.mrb[0].mxu0 %v1599
        %v2076 = vpop.f32.mrb[0].mxu0
        %v2077 = vadd.f32 0.0, %v2076
        %v2078 = vpop.f32.mrb[0].mxu0
        %2079 = vmatprep.mubr.f32.mxu0 0.0
        %2080 = vmatmul.mubr.f32.gmra.mrb[0].mxu0 %v1602
        %v2081 = vpop.f32.mrb[0].mxu0
        %v2082 = vadd.f32 0.0, %v2081
        %v2083 = vpop.f32.mrb[0].mxu0
        %2084 = vmatprep.mubr.f32.mxu0 0.0
        %2085 = vmatmul.mubr.f32.gmra.mrb[0].mxu0 %v1796
        %v2086 = vpop.f32.mrb[0].mxu0
        %v2087 = vadd.f32 0.0, %v2086
        %v2088 = vpop.f32.mrb[0].mxu0
        %2089 = vmatprep.mubr.f32.mxu0 0.0
        %2090 = vmatmul.mubr.f32.gmra.mrb[0].mxu0 %v1902
        %v2091 = vpop.f32.mrb[0].mxu0
        %v2092 = vadd.f32 0.0, %v2091
        %v2093 = vpop.f32.mrb[0].mxu0
        %2094 = vmatprep.mubr.f32.mxu0 0.0
        %2095 = vmatmul.mubr.f32.gmra.mrb[0].mxu0 %v2008
        %v2096 = vpop.f32.mrb[0].mxu0
        %v2097 = vpop.f32.mrb[0].mxu0
        %2098 = vdwg.mxu0
        %v2099 = vadd.f32 %v1993, %v2077
        %v2100 = vadd.f32 %v1994, %v2082
        %v2101 = vadd.f32 %v1995, %v2087
        %v2102 = vadd.f32 %v1996, %v2092
        %v2103 = vld [vmem:[%s5] sm:$0x1]
        %v2105 = vlaneseq
        %v2106 = vshrl.u32 %v2105, 7
        %v2107 = vsub.s32 0, %v2106
        %v2108 = vrot.slane %v2103, %v2107
        %v2110 = vadd.f32 %v2099, %v2108
        %v2111 = vadd.f32 %v2100, %v2108
        %v2112 = vadd.f32 %v2101, %v2108
        %v2113 = vadd.f32 %v2102, %v2108
        %v2114 = vmax.f32 %v2110, %v2111
        %v2115 = vmax.f32 %v2112, %v2113
        %v2116 = vld [vmem:[%s6] sm:$0xff]
        %v2117 = vld [vmem:[%s6 + $0x8] sm:$0xff]
        %v2118 = vld [vmem:[%s6 + $0x10] sm:$0xff]
        %v2119 = vld [vmem:[%s6 + $0x18] sm:$0xff]
        %v2120 = vld [vmem:[%s6 + $0x20] sm:$0xff]
        %v2121 = vld [vmem:[%s6 + $0x28] sm:$0xff]
        %v2122 = vld [vmem:[%s6 + $0x30] sm:$0x3]
        %vm2123 = vcmask 408576
        %v2125 = vsel %vm2123, %v2114, 0
        %v2128 = vsel %vm2123, %v2115, 0
        %vm2130 = vcmask 1041408
        %v2132 = vsel %vm2130, %v2122, 0
        %2134 = vmatprep.subr.mxu0 0.0
        %2135 = vmatpush1.msra.mxu0 %v2116
        %2136 = vmatprep.subr.mxu0 0.0
        %2137 = vmatpush1.msra.mxu0 %v2117
        %2138 = vmatprep.subr.mxu0 0.0
        %2139 = vmatpush1.msra.mxu0 %v2118
        %2140 = vmatprep.subr.mxu0 0.0
        %2141 = vmatpush1.msra.mxu0 %v2119
        %2142 = vmatprep.subr.mxu0 0.0
        %2143 = vmatpush1.msra.mxu0 %v2120
        %2144 = vmatprep.subr.mxu0 0.0
        %2145 = vmatpush1.msra.mxu0 %v2121
        %2146 = vmatprep.subr.mxu0 0.0
        %2147 = vmatpush1.msra.mxu0 %v2132
        %2148 = vmatprep.subr.mxu0 0.0
        %2149 = vmatpush1.msra.mxu0 0.0
        %2150 = vmatprep.subr.mxu0 0.0
        %2151 = vmatpush1.msra.mxu0 0.0
        %2152 = vmatprep.subr.mxu0 0.0
        %2153 = vmatpush1.msra.mxu0 0.0
        %2154 = vmatprep.subr.mxu0 0.0
        %2155 = vmatpush1.msra.mxu0 0.0
        %2156 = vmatprep.subr.mxu0 0.0
        %2157 = vmatpush1.msra.mxu0 0.0
        %2158 = vmatprep.subr.mxu0 0.0
        %2159 = vmatpush1.msra.mxu0 0.0
        %2160 = vmatprep.subr.mxu0 0.0
        %2161 = vmatpush1.msra.mxu0 0.0
        %2162 = vmatprep.subr.mxu0 0.0
        %2163 = vmatpush1.msra.mxu0 0.0
        %2164 = vmatprep.subr.mxu0 0.0
        %2165 = vmatpush1.msra.mxu0 0.0
        %2166 = vmatprep.subr.mxu0 0.0
        %2167 = vmatpush1.msra.mxu0 0.0
        %2168 = vmatprep.subr.mxu0 0.0
        %2169 = vmatpush1.msra.mxu0 0.0
        %2170 = vmatprep.subr.mxu0 0.0
        %2171 = vmatpush1.msra.mxu0 0.0
        %2172 = vmatprep.subr.mxu0 0.0
        %2173 = vmatpush1.msra.mxu0 0.0
        %2174 = vmatprep.subr.mxu0 0.0
        %2175 = vmatpush1.msra.mxu0 0.0
        %2176 = vmatprep.subr.mxu0 0.0
        %2177 = vmatpush1.msra.mxu0 0.0
        %2178 = vmatprep.subr.mxu0 0.0
        %2179 = vmatpush1.msra.mxu0 0.0
        %2180 = vmatprep.subr.mxu0 0.0
        %2181 = vmatpush1.msra.mxu0 0.0
        %2182 = vmatprep.subr.mxu0 0.0
        %2183 = vmatpush1.msra.mxu0 0.0
        %2184 = vmatprep.subr.mxu0 0.0
        %2185 = vmatpush1.msra.mxu0 0.0
        %2186 = vmatprep.subr.mxu0 0.0
        %2187 = vmatpush1.msra.mxu0 0.0
        %2188 = vmatprep.subr.mxu0 0.0
        %2189 = vmatpush1.msra.mxu0 0.0
        %2190 = vmatprep.subr.mxu0 0.0
        %2191 = vmatpush1.msra.mxu0 0.0
        %2192 = vmatprep.subr.mxu0 0.0
        %2193 = vmatpush1.msra.mxu0 0.0
        %2194 = vmatprep.subr.mxu0 0.0
        %2195 = vmatpush1.msra.mxu0 0.0
        %2196 = vmatprep.subr.mxu0 0.0
        %2197 = vmatpush1.msra.mxu0 0.0
        %2198 = vmatprep.mubr.f32.mxu0 0.0
        %2199 = vmatmul.mubr.f32.gmra.mrb[0].mxu0 %v2125
        %v2200 = vpop.f32.mrb[0].mxu0
        %v2201 = vadd.f32 0.0, %v2200
        %v2202 = vpop.f32.mrb[0].mxu0
        %2203 = vmatprep.mubr.f32.mxu0 0.0
        %2204 = vmatmul.mubr.f32.gmra.mrb[0].mxu0 %v2128
        %v2205 = vpop.f32.mrb[0].mxu0
        %v2206 = vadd.f32 0.0, %v2205
        %v2207 = vpop.f32.mrb[0].mxu0
        %2208 = vdwg.mxu0
        %s2209 = scalar_lea.vmem %s6, 56
        %v2210 = vld [vmem:[%s2209] sm:$0xff]
        %v2211 = vld [vmem:[%s2209 + $0x8] sm:$0xff]
        %v2212 = vld [vmem:[%s2209 + $0x10] sm:$0xff]
        %v2213 = vld [vmem:[%s2209 + $0x18] sm:$0xff]
        %v2214 = vld [vmem:[%s2209 + $0x20] sm:$0xff]
        %v2215 = vld [vmem:[%s2209 + $0x28] sm:$0xff]
        %v2216 = vld [vmem:[%s2209 + $0x30] sm:$0x3]
        %v2218 = vsel %vm2130, %v2216, 0
        %2220 = vmatprep.subr.mxu0 0.0
        %2221 = vmatpush1.msra.mxu0 %v2210
        %2222 = vmatprep.subr.mxu0 0.0
        %2223 = vmatpush1.msra.mxu0 %v2211
        %2224 = vmatprep.subr.mxu0 0.0
        %2225 = vmatpush1.msra.mxu0 %v2212
        %2226 = vmatprep.subr.mxu0 0.0
        %2227 = vmatpush1.msra.mxu0 %v2213
        %2228 = vmatprep.subr.mxu0 0.0
        %2229 = vmatpush1.msra.mxu0 %v2214
        %2230 = vmatprep.subr.mxu0 0.0
        %2231 = vmatpush1.msra.mxu0 %v2215
        %2232 = vmatprep.subr.mxu0 0.0
        %2233 = vmatpush1.msra.mxu0 %v2218
        %2234 = vmatprep.subr.mxu0 0.0
        %2235 = vmatpush1.msra.mxu0 0.0
        %2236 = vmatprep.subr.mxu0 0.0
        %2237 = vmatpush1.msra.mxu0 0.0
        %2238 = vmatprep.subr.mxu0 0.0
        %2239 = vmatpush1.msra.mxu0 0.0
        %2240 = vmatprep.subr.mxu0 0.0
        %2241 = vmatpush1.msra.mxu0 0.0
        %2242 = vmatprep.subr.mxu0 0.0
        %2243 = vmatpush1.msra.mxu0 0.0
        %2244 = vmatprep.subr.mxu0 0.0
        %2245 = vmatpush1.msra.mxu0 0.0
        %2246 = vmatprep.subr.mxu0 0.0
        %2247 = vmatpush1.msra.mxu0 0.0
        %2248 = vmatprep.subr.mxu0 0.0
        %2249 = vmatpush1.msra.mxu0 0.0
        %2250 = vmatprep.subr.mxu0 0.0
        %2251 = vmatpush1.msra.mxu0 0.0
        %2252 = vmatprep.subr.mxu0 0.0
        %2253 = vmatpush1.msra.mxu0 0.0
        %2254 = vmatprep.subr.mxu0 0.0
        %2255 = vmatpush1.msra.mxu0 0.0
        %2256 = vmatprep.subr.mxu0 0.0
        %2257 = vmatpush1.msra.mxu0 0.0
        %2258 = vmatprep.subr.mxu0 0.0
        %2259 = vmatpush1.msra.mxu0 0.0
        %2260 = vmatprep.subr.mxu0 0.0
        %2261 = vmatpush1.msra.mxu0 0.0
        %2262 = vmatprep.subr.mxu0 0.0
        %2263 = vmatpush1.msra.mxu0 0.0
        %2264 = vmatprep.subr.mxu0 0.0
        %2265 = vmatpush1.msra.mxu0 0.0
        %2266 = vmatprep.subr.mxu0 0.0
        %2267 = vmatpush1.msra.mxu0 0.0
        %2268 = vmatprep.subr.mxu0 0.0
        %2269 = vmatpush1.msra.mxu0 0.0
        %2270 = vmatprep.subr.mxu0 0.0
        %2271 = vmatpush1.msra.mxu0 0.0
        %2272 = vmatprep.subr.mxu0 0.0
        %2273 = vmatpush1.msra.mxu0 0.0
        %2274 = vmatprep.subr.mxu0 0.0
        %2275 = vmatpush1.msra.mxu0 0.0
        %2276 = vmatprep.subr.mxu0 0.0
        %2277 = vmatpush1.msra.mxu0 0.0
        %2278 = vmatprep.subr.mxu0 0.0
        %2279 = vmatpush1.msra.mxu0 0.0
        %2280 = vmatprep.subr.mxu0 0.0
        %2281 = vmatpush1.msra.mxu0 0.0
        %2282 = vmatprep.subr.mxu0 0.0
        %2283 = vmatpush1.msra.mxu0 0.0
        %2284 = vmatprep.mubr.f32.mxu0 0.0
        %2285 = vmatmul.mubr.f32.gmra.mrb[0].mxu0 %v2125
        %v2286 = vpop.f32.mrb[0].mxu0
        %v2287 = vadd.f32 0.0, %v2286
        %v2288 = vpop.f32.mrb[0].mxu0
        %2289 = vmatprep.mubr.f32.mxu0 0.0
        %2290 = vmatmul.mubr.f32.gmra.mrb[0].mxu0 %v2128
        %v2291 = vpop.f32.mrb[0].mxu0
        %v2292 = vadd.f32 0.0, %v2291
        %v2293 = vpop.f32.mrb[0].mxu0
        %2294 = vdwg.mxu0
        %v2295 = vmax.f32 %v2201, %v2287
        %v2296 = vmax.f32 %v2206, %v2292
        %v2297 = vmax.f32 %v2295, 0.0
        %v2298 = vmax.f32 %v2296, 0.0
        %v2299 = vld [vmem:[%s8] sm:$0x1]
        %v2300 = vld [vmem:[%s7] sm:$0xff]
        %v2301 = vld [vmem:[%s7 + $0x8] sm:$0xff]
        %v2302 = vld [vmem:[%s7 + $0x10] sm:$0xf]
        %vm2303 = vcmask 162816
        %v2305 = vsel %vm2303, %v2297, 0
        %v2308 = vsel %vm603, %v2302, 0
        %2310 = vmatprep.subr.mxu0 0.0
        %2311 = vmatpush1.msra.mxu0 %v2300
        %2312 = vmatprep.subr.mxu0 0.0
        %2313 = vmatpush1.msra.mxu0 %v2301
        %2314 = vmatprep.subr.mxu0 0.0
        %2315 = vmatpush1.msra.mxu0 %v2308
        %2316 = vmatprep.subr.mxu0 0.0
        %2317 = vmatpush1.msra.mxu0 0.0
        %2318 = vmatprep.subr.mxu0 0.0
        %2319 = vmatpush1.msra.mxu0 0.0
        %2320 = vmatprep.subr.mxu0 0.0
        %2321 = vmatpush1.msra.mxu0 0.0
        %2322 = vmatprep.subr.mxu0 0.0
        %2323 = vmatpush1.msra.mxu0 0.0
        %2324 = vmatprep.subr.mxu0 0.0
        %2325 = vmatpush1.msra.mxu0 0.0
        %2326 = vmatprep.subr.mxu0 0.0
        %2327 = vmatpush1.msra.mxu0 0.0
        %2328 = vmatprep.subr.mxu0 0.0
        %2329 = vmatpush1.msra.mxu0 0.0
        %2330 = vmatprep.subr.mxu0 0.0
        %2331 = vmatpush1.msra.mxu0 0.0
        %2332 = vmatprep.subr.mxu0 0.0
        %2333 = vmatpush1.msra.mxu0 0.0
        %2334 = vmatprep.subr.mxu0 0.0
        %2335 = vmatpush1.msra.mxu0 0.0
        %2336 = vmatprep.subr.mxu0 0.0
        %2337 = vmatpush1.msra.mxu0 0.0
        %2338 = vmatprep.subr.mxu0 0.0
        %2339 = vmatpush1.msra.mxu0 0.0
        %2340 = vmatprep.subr.mxu0 0.0
        %2341 = vmatpush1.msra.mxu0 0.0
        %2342 = vmatprep.subr.mxu0 0.0
        %2343 = vmatpush1.msra.mxu0 0.0
        %2344 = vmatprep.subr.mxu0 0.0
        %2345 = vmatpush1.msra.mxu0 0.0
        %2346 = vmatprep.subr.mxu0 0.0
        %2347 = vmatpush1.msra.mxu0 0.0
        %2348 = vmatprep.subr.mxu0 0.0
        %2349 = vmatpush1.msra.mxu0 0.0
        %2350 = vmatprep.subr.mxu0 0.0
        %2351 = vmatpush1.msra.mxu0 0.0
        %2352 = vmatprep.subr.mxu0 0.0
        %2353 = vmatpush1.msra.mxu0 0.0
        %2354 = vmatprep.subr.mxu0 0.0
        %2355 = vmatpush1.msra.mxu0 0.0
        %2356 = vmatprep.subr.mxu0 0.0
        %2357 = vmatpush1.msra.mxu0 0.0
        %2358 = vmatprep.subr.mxu0 0.0
        %2359 = vmatpush1.msra.mxu0 0.0
        %2360 = vmatprep.subr.mxu0 0.0
        %2361 = vmatpush1.msra.mxu0 0.0
        %2362 = vmatprep.subr.mxu0 0.0
        %2363 = vmatpush1.msra.mxu0 0.0
        %2364 = vmatprep.subr.mxu0 0.0
        %2365 = vmatpush1.msra.mxu0 0.0
        %2366 = vmatprep.subr.mxu0 0.0
        %2367 = vmatpush1.msra.mxu0 0.0
        %2368 = vmatprep.subr.mxu0 0.0
        %2369 = vmatpush1.msra.mxu0 0.0
        %2370 = vmatprep.subr.mxu0 0.0
        %2371 = vmatpush1.msra.mxu0 0.0
        %2372 = vmatprep.subr.mxu0 0.0
        %2373 = vmatpush1.msra.mxu0 0.0
        %2374 = vmatprep.mubr.f32.mxu0 0.0
        %2375 = vmatmul.mubr.f32.gmra.mrb[0].mxu0 %v2305
        %v2376 = vpop.f32.mrb[0].mxu0
        %v2377 = vadd.f32 0.0, %v2376
        %v2378 = vpop.f32.mrb[0].mxu0
        %2379 = vdwg.mxu0
        %v2381 = vlaneseq
        %v2382 = vshrl.u32 %v2381, 7
        %v2383 = vsub.s32 0, %v2382
        %v2384 = vrot.slane %v2299, %v2383
        %v2386 = vadd.f32 %v2384, %v2377
        %s2387 = scalar_lea.vmem %s7, 24
        %v2388 = vld [vmem:[%s2387] sm:$0xff]
        %v2389 = vld [vmem:[%s2387 + $0x8] sm:$0xff]
        %v2390 = vld [vmem:[%s2387 + $0x10] sm:$0xf]
        %v2392 = vsel %vm2303, %v2298, 0
        %v2395 = vsel %vm603, %v2390, 0
        %2397 = vmatprep.subr.mxu0 0.0
        %2398 = vmatpush1.msra.mxu0 %v2388
        %2399 = vmatprep.subr.mxu0 0.0
        %2400 = vmatpush1.msra.mxu0 %v2389
        %2401 = vmatprep.subr.mxu0 0.0
        %2402 = vmatpush1.msra.mxu0 %v2395
        %2403 = vmatprep.subr.mxu0 0.0
        %2404 = vmatpush1.msra.mxu0 0.0
        %2405 = vmatprep.subr.mxu0 0.0
        %2406 = vmatpush1.msra.mxu0 0.0
        %2407 = vmatprep.subr.mxu0 0.0
        %2408 = vmatpush1.msra.mxu0 0.0
        %2409 = vmatprep.subr.mxu0 0.0
        %2410 = vmatpush1.msra.mxu0 0.0
        %2411 = vmatprep.subr.mxu0 0.0
        %2412 = vmatpush1.msra.mxu0 0.0
        %2413 = vmatprep.subr.mxu0 0.0
        %2414 = vmatpush1.msra.mxu0 0.0
        %2415 = vmatprep.subr.mxu0 0.0
        %2416 = vmatpush1.msra.mxu0 0.0
        %2417 = vmatprep.subr.mxu0 0.0
        %2418 = vmatpush1.msra.mxu0 0.0
        %2419 = vmatprep.subr.mxu0 0.0
        %2420 = vmatpush1.msra.mxu0 0.0
        %2421 = vmatprep.subr.mxu0 0.0
        %2422 = vmatpush1.msra.mxu0 0.0
        %2423 = vmatprep.subr.mxu0 0.0
        %2424 = vmatpush1.msra.mxu0 0.0
        %2425 = vmatprep.subr.mxu0 0.0
        %2426 = vmatpush1.msra.mxu0 0.0
        %2427 = vmatprep.subr.mxu0 0.0
        %2428 = vmatpush1.msra.mxu0 0.0
        %2429 = vmatprep.subr.mxu0 0.0
        %2430 = vmatpush1.msra.mxu0 0.0
        %2431 = vmatprep.subr.mxu0 0.0
        %2432 = vmatpush1.msra.mxu0 0.0
        %2433 = vmatprep.subr.mxu0 0.0
        %2434 = vmatpush1.msra.mxu0 0.0
        %2435 = vmatprep.subr.mxu0 0.0
        %2436 = vmatpush1.msra.mxu0 0.0
        %2437 = vmatprep.subr.mxu0 0.0
        %2438 = vmatpush1.msra.mxu0 0.0
        %2439 = vmatprep.subr.mxu0 0.0
        %2440 = vmatpush1.msra.mxu0 0.0
        %2441 = vmatprep.subr.mxu0 0.0
        %2442 = vmatpush1.msra.mxu0 0.0
        %2443 = vmatprep.subr.mxu0 0.0
        %2444 = vmatpush1.msra.mxu0 0.0
        %2445 = vmatprep.subr.mxu0 0.0
        %2446 = vmatpush1.msra.mxu0 0.0
        %2447 = vmatprep.subr.mxu0 0.0
        %2448 = vmatpush1.msra.mxu0 0.0
        %2449 = vmatprep.subr.mxu0 0.0
        %2450 = vmatpush1.msra.mxu0 0.0
        %2451 = vmatprep.subr.mxu0 0.0
        %2452 = vmatpush1.msra.mxu0 0.0
        %2453 = vmatprep.subr.mxu0 0.0
        %2454 = vmatpush1.msra.mxu0 0.0
        %2455 = vmatprep.subr.mxu0 0.0
        %2456 = vmatpush1.msra.mxu0 0.0
        %2457 = vmatprep.subr.mxu0 0.0
        %2458 = vmatpush1.msra.mxu0 0.0
        %2459 = vmatprep.subr.mxu0 0.0
        %2460 = vmatpush1.msra.mxu0 0.0
        %2461 = vmatprep.mubr.f32.mxu0 0.0
        %2462 = vmatmul.mubr.f32.gmra.mrb[0].mxu0 %v2392
        %v2463 = vpop.f32.mrb[0].mxu0
        %v2464 = vadd.f32 0.0, %v2463
        %v2465 = vpop.f32.mrb[0].mxu0
        %2466 = vdwg.mxu0
        %v2467 = vadd.f32 %v2386, %v2464
        %v2468 = vmax.f32 %v2467, 0.0
        %v2469 = vld [vmem:[%s9] sm:$0xff]
        %v2470 = vld [vmem:[%s9 + $0x8] sm:$0x3]
        %v2471 = vld [vmem:[%s10] sm:$0x1]
        %v2473 = vlaneseq
        %v2474 = vshrl.u32 %v2473, 7
        %v2475 = vsub.s32 0, %v2474
        %v2476 = vrot.slane %v2471, %v2475
        %vm2478 = vcmask 80896
        %v2480 = vsel %vm2478, %v2468, 0
        %v2483 = vsel %vm2130, %v2470, 0
        %2485 = vmatprep.subr.mxu0 0.0
        %2486 = vmatpush1.msra.mxu0 %v2469
        %2487 = vmatprep.subr.mxu0 0.0
        %2488 = vmatpush1.msra.mxu0 %v2483
        %2489 = vmatprep.subr.mxu0 0.0
        %2490 = vmatpush1.msra.mxu0 0.0
        %2491 = vmatprep.subr.mxu0 0.0
        %2492 = vmatpush1.msra.mxu0 0.0
        %2493 = vmatprep.subr.mxu0 0.0
        %2494 = vmatpush1.msra.mxu0 0.0
        %2495 = vmatprep.subr.mxu0 0.0
        %2496 = vmatpush1.msra.mxu0 0.0
        %2497 = vmatprep.subr.mxu0 0.0
        %2498 = vmatpush1.msra.mxu0 0.0
        %2499 = vmatprep.subr.mxu0 0.0
        %2500 = vmatpush1.msra.mxu0 0.0
        %2501 = vmatprep.subr.mxu0 0.0
        %2502 = vmatpush1.msra.mxu0 0.0
        %2503 = vmatprep.subr.mxu0 0.0
        %2504 = vmatpush1.msra.mxu0 0.0
        %2505 = vmatprep.subr.mxu0 0.0
        %2506 = vmatpush1.msra.mxu0 0.0
        %2507 = vmatprep.subr.mxu0 0.0
        %2508 = vmatpush1.msra.mxu0 0.0
        %2509 = vmatprep.subr.mxu0 0.0
        %2510 = vmatpush1.msra.mxu0 0.0
        %2511 = vmatprep.subr.mxu0 0.0
        %2512 = vmatpush1.msra.mxu0 0.0
        %2513 = vmatprep.subr.mxu0 0.0
        %2514 = vmatpush1.msra.mxu0 0.0
        %2515 = vmatprep.subr.mxu0 0.0
        %2516 = vmatpush1.msra.mxu0 0.0
        %2517 = vmatprep.subr.mxu0 0.0
        %2518 = vmatpush1.msra.mxu0 0.0
        %2519 = vmatprep.subr.mxu0 0.0
        %2520 = vmatpush1.msra.mxu0 0.0
        %2521 = vmatprep.subr.mxu0 0.0
        %2522 = vmatpush1.msra.mxu0 0.0
        %2523 = vmatprep.subr.mxu0 0.0
        %2524 = vmatpush1.msra.mxu0 0.0
        %2525 = vmatprep.subr.mxu0 0.0
        %2526 = vmatpush1.msra.mxu0 0.0
        %2527 = vmatprep.subr.mxu0 0.0
        %2528 = vmatpush1.msra.mxu0 0.0
        %2529 = vmatprep.subr.mxu0 0.0
        %2530 = vmatpush1.msra.mxu0 0.0
        %2531 = vmatprep.subr.mxu0 0.0
        %2532 = vmatpush1.msra.mxu0 0.0
        %2533 = vmatprep.subr.mxu0 0.0
        %2534 = vmatpush1.msra.mxu0 0.0
        %2535 = vmatprep.subr.mxu0 0.0
        %2536 = vmatpush1.msra.mxu0 0.0
        %2537 = vmatprep.subr.mxu0 0.0
        %2538 = vmatpush1.msra.mxu0 0.0
        %2539 = vmatprep.subr.mxu0 0.0
        %2540 = vmatpush1.msra.mxu0 0.0
        %2541 = vmatprep.subr.mxu0 0.0
        %2542 = vmatpush1.msra.mxu0 0.0
        %2543 = vmatprep.subr.mxu0 0.0
        %2544 = vmatpush1.msra.mxu0 0.0
        %2545 = vmatprep.subr.mxu0 0.0
        %2546 = vmatpush1.msra.mxu0 0.0
        %2547 = vmatprep.subr.mxu0 0.0
        %2548 = vmatpush1.msra.mxu0 0.0
        %2549 = vmatprep.mubr.f32.mxu0 0.0
        %2550 = vmatmul.mubr.f32.gmra.mrb[0].mxu0 %v2480
        %v2551 = vpop.f32.mrb[0].mxu0
        %v2552 = vadd.f32 %v2476, %v2551
        %v2553 = vpop.f32.mrb[0].mxu0
        %2554 = vdwg.mxu0
        %vm2555 = vcmask 97280
        %2556 = vst.msk [vmem:[%s494] sm:$0xff] %vm2555, %v2552
        %p2557 = scmp.lt.s32.totalorder %s22, 1
        %s2558 = scalar_select %p2557, %s22, 1
        %s2559 = smul.addr %s2558, 8
        %s2560 = scalar_lea.vmem %s11, %s2559
        // Predicated region
        $region103: #{conv_regressor_forward.1} parent=97 // pred_check
          %p2561 = pneg %p276
        $region104: #{conv_regressor_forward.1} parent=97 // pred_check_branch
          %2563 = sbr.rel (%p2561) target = $region106
        $region105: #{conv_regressor_forward.1} parent=97 // pred_region
          _
        $region106: #{conv_regressor_forward.1} parent=97 // pred_fallthru
          _
      $region98: #{conv_regressor_forward.1} parent=5 // pred_fallthru
        _
      %p2564 = scmp.le.s32.totalorder 2, %s17
      // Predicated region
      $region107: #{conv_regressor_forward.1} parent=5 // pred_check
        %p2565 = pneg %p2564
      $region108: #{conv_regressor_forward.1} parent=5 // pred_check_branch
        %2567 = sbr.rel (%p2565) target = $region110
      $region109: #{conv_regressor_forward.1} parent=5 // pred_region
        %s2568 = ssub.s32 %s17, 2
        // Predicated region
        $region111: #{conv_regressor_forward.1} parent=109 // pred_check
          %p2569 = pneg %p282
        $region112: #{conv_regressor_forward.1} parent=109 // pred_check_branch
          %2571 = sbr.rel (%p2569) target = $region114
        $region113: #{conv_regressor_forward.1} parent=109 // pred_region
          %p2572 = scmp.lt.s32.totalorder %s23, 1
          %s2573 = scalar_select %p2572, %s23, 1
          %s2574 = smul.addr %s2573, 8
          %s2575 = scalar_lea.vmem %s11, %s2574
        $region114: #{conv_regressor_forward.1} parent=109 // pred_fallthru
          _
      $region110: #{conv_regressor_forward.1} parent=5 // pred_fallthru
        _
    $region6: #{conv_regressor_forward.1} parent=1 // loop_footer
      %s21 = sadd.s32 1, %s17
    $region7: #{conv_regressor_forward.1} parent=1 // loop_footer_branch
      %16 = sbr.rel target = $region3
    $region8: #{conv_regressor_forward.1} parent=1 // loop_exit
      _

</llo_original>
